<compile_context>
chip_gen: v5e
topology: v5e:2x2
jax: 0.10.0
libtpu: 0.0.40
codegen_flags: <defaults>
</compile_context>

<pallas_src>
import functools

import jax
import jax.numpy as jnp
from jax.experimental import pallas as pl
from jax.experimental.pallas import tpu as pltpu


_LANE = 128                       # lane width; final 1-wide output padded to this
_DIMS = (1, 256, 256, 128, 64, 32, 1)


def _round_up(n, m):
    return ((n + m - 1) // m) * m


def _vmem_capacity_bytes():
    try:
        return int(pltpu.get_tpu_info().vmem_capacity_bytes)
    except Exception:
        return 64 << 20           # conservative default (v7x per-core VMEM)


# ----------------------------------------------------------------------------
# Kernel: all six GCN layers fused, everything resident in VMEM.
# ----------------------------------------------------------------------------
def _fused_gcn_kernel(a_ref, x_ref, d_ref,
                      w1_ref, b1_ref, w2_ref, b2_ref, w3_ref, b3_ref,
                      w4_ref, b4_ref, w5_ref, b5_ref, w6_ref, b6_ref,
                      o_ref):
    a = a_ref[...]                                     # bf16 [Np, Np] structural A+I (exact)
    d = d_ref[...]                                     # f32  [Np, 1]  D^{-1/2} (0 on pad rows)

    # ---- layer 1 (in=1, out=256): aggregate first (matvec on the MXU), then
    # the rank-1 expansion s * w1 + b1 runs on the VPU -- no K=1 MXU pass.
    dx = (x_ref[...] * d).astype(jnp.bfloat16)                       # [Np, 1]
    s = jnp.dot(a, dx, preferred_element_type=jnp.float32) * d       # [Np, 1] f32
    h = jnp.maximum(s * w1_ref[...] + b1_ref[...], 0.0)              # [Np, 256]
    h = h.astype(jnp.bfloat16)                          # hidden state kept bf16

    # ---- layers 2..5: h = relu(D^-1/2 (A+I) D^-1/2 (h @ W) + b)
    for w_ref, b_ref in ((w2_ref, b2_ref), (w3_ref, b3_ref),
                         (w4_ref, b4_ref), (w5_ref, b5_ref)):
        xw = jnp.dot(h, w_ref[...], preferred_element_type=jnp.float32)
        xw = (xw * d).astype(jnp.bfloat16)              # right D^{-1/2}, exact in f32
        agg = jnp.dot(a, xw, preferred_element_type=jnp.float32)
        h = jnp.maximum(agg * d + b_ref[...], 0.0).astype(jnp.bfloat16)

    # ---- layer 6 (out=1, zero-padded to 128 lanes): store lane-dense logits.
    # Sigmoid is applied in the wrapper on the single real column.
    xw = jnp.dot(h, w6_ref[...], preferred_element_type=jnp.float32)
    xw = (xw * d).astype(jnp.bfloat16)
    agg = jnp.dot(a, xw, preferred_element_type=jnp.float32)
    o_ref[...] = (agg * d + b6_ref[...]).astype(o_ref.dtype)


# ----------------------------------------------------------------------------
# Graph / parameter preparation (hoist + cache when the graph is static).
# ----------------------------------------------------------------------------
def build_graph(edge_index, num_nodes):
    """Return (A+I as bf16 [Np, Np], D^{-1/2} as f32 [Np, 1]) with Np padded to 128.

    edge_index: int32 [2, E], row 0 = source j, row 1 = target i (A[i, j] = 1).
    Matches torch_geometric GCNConv defaults (add_self_loops, symmetric norm).
    """
    n_pad = max(_round_up(num_nodes, _LANE), _LANE)
    src, dst = edge_index[0], edge_index[1]
    a = jnp.zeros((n_pad, n_pad), jnp.float32)
    a = a.at[dst, src].add(1.0)
    node = jnp.arange(num_nodes, dtype=jnp.int32)
    a = a.at[node, node].add(1.0)                      # self loops on real nodes only
    deg = a.sum(axis=1)
    d_inv_sqrt = jnp.where(deg > 0.0, jax.lax.rsqrt(deg), 0.0)
    return a.astype(jnp.bfloat16), d_inv_sqrt.reshape(n_pad, 1).astype(jnp.float32)


def _prepare_params(params):
    (w1, b1), (w2, b2), (w3, b3), (w4, b4), (w5, b5), (w6, b6) = params
    # Layer-1 weight stays f32: it feeds a VPU rank-1 expansion, not the MXU.
    w1r = w1.reshape(1, _DIMS[1]).astype(jnp.float32)
    # Pad layer-6 weight/bias from 1 -> 128 output lanes with zeros.
    w6p = jnp.zeros((_DIMS[5], _LANE), jnp.float32).at[:, :1].set(w6)
    b6p = jnp.zeros((_LANE,), jnp.float32).at[:1].set(b6)
    ws = [w.astype(jnp.bfloat16) for w in (w2, w3, w4, w5, w6p)]
    bs = [b.reshape(1, -1).astype(jnp.float32) for b in (b1, b2, b3, b4, b5, b6p)]
    return (w1r, bs[0], ws[0], bs[1], ws[1], bs[2],
            ws[2], bs[3], ws[3], bs[4], ws[4], bs[5])


# ----------------------------------------------------------------------------
# Forward pass.
# ----------------------------------------------------------------------------
def _dense_forward_xla(x_pad, a01, d_inv_sqrt, params):
    # TODO(synk): replace with a row-tiled Pallas path (A blocked (TM, Np),
    # "parallel" row axis) for adjacencies that do not fit VMEM.
    a01f = a01.astype(jnp.float32)
    h = x_pad
    for li, (w, b) in enumerate(params):
        xw = (h @ w) * d_inv_sqrt
        h = d_inv_sqrt * (a01f @ xw) + b[None, :]
        if li < 5:
            h = jnp.maximum(h, 0.0)
    return h[:, :1]


def _forward_from_graph(x, a01, d_inv_sqrt, params):
    num_nodes = x.shape[0]
    n_pad = a01.shape[0]
    x_pad = jnp.zeros((n_pad, 1), jnp.float32).at[:num_nodes].set(
        x.astype(jnp.float32).reshape(num_nodes, 1))

    # VMEM requirement (single-buffered: no grid => exactly one copy of A).
    vmem_need = int(2 * n_pad * n_pad            # bf16 structural adjacency
                    + 8 * 1024 * n_pad           # live [Np,256]-class temporaries
                    + 4 * _LANE * n_pad          # lane-dense f32 logits
                    + (4 << 20))                 # weights + slack
    vmem_budget = _vmem_capacity_bytes() - (8 << 20)

    if vmem_need > vmem_budget:
        logits = _dense_forward_xla(x_pad, a01, d_inv_sqrt, params)
        return jax.nn.sigmoid(logits[:num_nodes])

    kernel_params = _prepare_params(params)

    flops = int(2 * n_pad * n_pad * (1 + 256 + 128 + 64 + 32 + _LANE)
                + 2 * n_pad * (256 * 256 + 256 * 128 + 128 * 64
                               + 64 * 32 + 32 * _LANE))
    bytes_accessed = int(2 * n_pad * n_pad + 8 * n_pad
                         + 4 * _LANE * n_pad + (1 << 20))

    out = pl.pallas_call(
        _fused_gcn_kernel,
        out_shape=jax.ShapeDtypeStruct((n_pad, _LANE), jnp.float32),
        in_specs=[pl.BlockSpec(memory_space=pltpu.MemorySpace.VMEM)] * 15,
        out_specs=pl.BlockSpec(memory_space=pltpu.MemorySpace.VMEM),
        compiler_params=pltpu.CompilerParams(
            vmem_limit_bytes=int(min(max(vmem_need, 32 << 20), vmem_budget))),
        cost_estimate=pl.CostEstimate(
            flops=flops, transcendentals=0, bytes_accessed=bytes_accessed),
    )(a01, x_pad, d_inv_sqrt, *kernel_params)

    # Sigmoid only on the single real column (lane padding existed solely for
    # an unmasked, lane-dense store).
    return jax.nn.sigmoid(out[:num_nodes, :1])


def _net_forward_impl(x, edge_index, params):
    """Pallas implementation of Net.forward(x, edge_index)."""
    a01, d_inv_sqrt = build_graph(edge_index, x.shape[0])
    return _forward_from_graph(x, a01, d_inv_sqrt, params)


# Spec-parity API (builds the adjacency per call, like the PyTorch module).
net_forward = jax.jit(_net_forward_impl)

# Static-graph API: hoist build_graph(...) out of the per-call path.
net_forward_prebuilt = jax.jit(_forward_from_graph)


# ----------------------------------------------------------------------------
# Params / reference.
# ----------------------------------------------------------------------------
def init_params(key):
    """Deterministic Glorot-style init for the 6 GCNConv layers."""
    params = []
    for li in range(6):
        f_in, f_out = _DIMS[li], _DIMS[li + 1]
        key, wk, bk = jax.random.split(key, 3)
        scale = jnp.sqrt(6.0 / (f_in + f_out)).astype(jnp.float32)
        w = jax.random.uniform(wk, (f_in, f_out), jnp.float32,
                               minval=-scale, maxval=scale)
        b = 0.1 * jax.random.normal(bk, (f_out,), jnp.float32)
        params.append((w, b))
    return params


def reference_forward(x, edge_index, params):
    """Pure-JAX f32 reference for correctness checking."""
    n = x.shape[0]
    src, dst = edge_index[0], edge_index[1]
    a = jnp.zeros((n, n), jnp.float32).at[dst, src].add(1.0) + jnp.eye(n)
    deg = a.sum(axis=1)
    dis = jnp.where(deg > 0, 1.0 / jnp.sqrt(deg), 0.0)
    a_hat = dis[:, None] * a * dis[None, :]
    h = x.astype(jnp.float32)
    for li, (w, b) in enumerate(params):
        h = a_hat @ (h @ w) + b[None, :]
        h = jnp.maximum(h, 0.0) if li < 5 else jax.nn.sigmoid(h)
    return h


if __name__ == "__main__":
    key = jax.random.PRNGKey(0)

    # Small graph: N=64 nodes, node features [N, 1] (conv1 has in_channels=1).
    N = 64
    kx, kp = jax.random.split(key)
    x = jax.random.normal(kx, (N, 1), jnp.float32)

    # Deterministic ring graph, both directions: E = 2N edges.
    idx = jnp.arange(N, dtype=jnp.int32)
    nxt = (idx + 1) % N
    edge_index = jnp.stack(
        [jnp.concatenate([idx, nxt]), jnp.concatenate([nxt, idx])], axis=0)

    params = init_params(kp)

    # Static-graph path: adjacency build + casts hoisted out of the forward.
    a01, d_inv_sqrt = jax.block_until_ready(build_graph(edge_index, N))
    out = jax.block_until_ready(net_forward_prebuilt(x, a01, d_inv_sqrt, params))

    # Spec-parity path (Net.forward(x, edge_index)).
    out2 = jax.block_until_ready(net_forward(x, edge_index, params))

    ref = reference_forward(x, edge_index, params)
    assert out.shape == (N, 1)
    # bf16 MXU operands with f32 accumulation and exact normalization.
    assert jnp.allclose(out, ref, atol=3e-2), "mismatch vs reference (prebuilt)"
    assert jnp.allclose(out2, ref, atol=3e-2), "mismatch vs reference"

    print("KERNEL_OK")
</pallas_src>

<mosaic_0001>
module attributes {stable_mosaic.version = 11 : i64} {
  func.func @_fused_gcn_kernel(%arg0: memref<128x128xbf16, #tpu.memory_space<vmem>>, %arg1: memref<128x1xf32, #tpu.memory_space<vmem>>, %arg2: memref<128x1xf32, #tpu.memory_space<vmem>>, %arg3: memref<1x256xf32, #tpu.memory_space<vmem>>, %arg4: memref<1x256xf32, #tpu.memory_space<vmem>>, %arg5: memref<256x256xbf16, #tpu.memory_space<vmem>>, %arg6: memref<1x256xf32, #tpu.memory_space<vmem>>, %arg7: memref<256x128xbf16, #tpu.memory_space<vmem>>, %arg8: memref<1x128xf32, #tpu.memory_space<vmem>>, %arg9: memref<128x64xbf16, #tpu.memory_space<vmem>>, %arg10: memref<1x64xf32, #tpu.memory_space<vmem>>, %arg11: memref<64x32xbf16, #tpu.memory_space<vmem>>, %arg12: memref<1x32xf32, #tpu.memory_space<vmem>>, %arg13: memref<32x128xbf16, #tpu.memory_space<vmem>>, %arg14: memref<1x128xf32, #tpu.memory_space<vmem>>, %arg15: memref<128x128xf32, #tpu.memory_space<vmem>>) attributes {dimension_semantics = [], scalar_prefetch = 0 : i64, scratch_operands = 0 : i64, tpu.core_type = #tpu.core_type<tc>} {
    %c0 = arith.constant 0 : index
    %c0_0 = arith.constant 0 : index
    %0 = vector.load %arg0[%c0, %c0_0] : memref<128x128xbf16, #tpu.memory_space<vmem>>, vector<128x128xbf16>
    %c0_1 = arith.constant 0 : index
    %c0_2 = arith.constant 0 : index
    %1 = vector.load %arg2[%c0_1, %c0_2] : memref<128x1xf32, #tpu.memory_space<vmem>>, vector<128x1xf32>
    %c0_3 = arith.constant 0 : index
    %c0_4 = arith.constant 0 : index
    %2 = vector.load %arg1[%c0_3, %c0_4] : memref<128x1xf32, #tpu.memory_space<vmem>>, vector<128x1xf32>
    %3 = arith.mulf %2, %1 : vector<128x1xf32>
    %4 = arith.truncf %3 : vector<128x1xf32> to vector<128x1xbf16>
    %cst = arith.constant dense<0.000000e+00> : vector<128x1xf32>
    %5 = tpu.matmul %0, %4, %cst {dimension_numbers = #tpu.dot_dimension_numbers<[1], [0], [0], [1], [0, 0, 1, 1], [], []>} : vector<128x128xbf16>, vector<128x1xbf16>, vector<128x1xf32> -> vector<128x1xf32>
    %6 = arith.mulf %5, %1 : vector<128x1xf32>
    %c0_5 = arith.constant 0 : index
    %c0_6 = arith.constant 0 : index
    %7 = vector.load %arg3[%c0_5, %c0_6] : memref<1x256xf32, #tpu.memory_space<vmem>>, vector<1x256xf32>
    %8 = vector.broadcast %6 : vector<128x1xf32> to vector<128x256xf32>
    %9 = vector.broadcast %7 : vector<1x256xf32> to vector<128x256xf32>
    %10 = arith.mulf %8, %9 : vector<128x256xf32>
    %c0_7 = arith.constant 0 : index
    %c0_8 = arith.constant 0 : index
    %11 = vector.load %arg4[%c0_7, %c0_8] : memref<1x256xf32, #tpu.memory_space<vmem>>, vector<1x256xf32>
    %12 = vector.broadcast %11 : vector<1x256xf32> to vector<128x256xf32>
    %13 = arith.addf %10, %12 : vector<128x256xf32>
    %cst_9 = arith.constant 0.000000e+00 : f32
    %14 = vector.broadcast %cst_9 : f32 to vector<128x256xf32>
    %15 = arith.maximumf %13, %14 : vector<128x256xf32>
    %16 = arith.truncf %15 : vector<128x256xf32> to vector<128x256xbf16>
    %c0_10 = arith.constant 0 : index
    %c0_11 = arith.constant 0 : index
    %17 = vector.load %arg5[%c0_10, %c0_11] : memref<256x256xbf16, #tpu.memory_space<vmem>>, vector<256x256xbf16>
    %cst_12 = arith.constant dense<0.000000e+00> : vector<128x256xf32>
    %18 = tpu.matmul %16, %17, %cst_12 {dimension_numbers = #tpu.dot_dimension_numbers<[1], [0], [0], [1], [0, 0, 1, 1], [], []>} : vector<128x256xbf16>, vector<256x256xbf16>, vector<128x256xf32> -> vector<128x256xf32>
    %19 = vector.broadcast %1 : vector<128x1xf32> to vector<128x256xf32>
    %20 = arith.mulf %18, %19 : vector<128x256xf32>
    %21 = arith.truncf %20 : vector<128x256xf32> to vector<128x256xbf16>
    %cst_13 = arith.constant dense<0.000000e+00> : vector<128x256xf32>
    %22 = tpu.matmul %0, %21, %cst_13 {dimension_numbers = #tpu.dot_dimension_numbers<[1], [0], [0], [1], [0, 0, 1, 1], [], []>} : vector<128x128xbf16>, vector<128x256xbf16>, vector<128x256xf32> -> vector<128x256xf32>
    %23 = vector.broadcast %1 : vector<128x1xf32> to vector<128x256xf32>
    %24 = arith.mulf %22, %23 : vector<128x256xf32>
    %c0_14 = arith.constant 0 : index
    %c0_15 = arith.constant 0 : index
    %25 = vector.load %arg6[%c0_14, %c0_15] : memref<1x256xf32, #tpu.memory_space<vmem>>, vector<1x256xf32>
    %26 = vector.broadcast %25 : vector<1x256xf32> to vector<128x256xf32>
    %27 = arith.addf %24, %26 : vector<128x256xf32>
    %cst_16 = arith.constant 0.000000e+00 : f32
    %28 = vector.broadcast %cst_16 : f32 to vector<128x256xf32>
    %29 = arith.maximumf %27, %28 : vector<128x256xf32>
    %30 = arith.truncf %29 : vector<128x256xf32> to vector<128x256xbf16>
    %c0_17 = arith.constant 0 : index
    %c0_18 = arith.constant 0 : index
    %31 = vector.load %arg7[%c0_17, %c0_18] : memref<256x128xbf16, #tpu.memory_space<vmem>>, vector<256x128xbf16>
    %cst_19 = arith.constant dense<0.000000e+00> : vector<128x128xf32>
    %32 = tpu.matmul %30, %31, %cst_19 {dimension_numbers = #tpu.dot_dimension_numbers<[1], [0], [0], [1], [0, 0, 1, 1], [], []>} : vector<128x256xbf16>, vector<256x128xbf16>, vector<128x128xf32> -> vector<128x128xf32>
    %33 = vector.broadcast %1 : vector<128x1xf32> to vector<128x128xf32>
    %34 = arith.mulf %32, %33 : vector<128x128xf32>
    %35 = arith.truncf %34 : vector<128x128xf32> to vector<128x128xbf16>
    %cst_20 = arith.constant dense<0.000000e+00> : vector<128x128xf32>
    %36 = tpu.matmul %0, %35, %cst_20 {dimension_numbers = #tpu.dot_dimension_numbers<[1], [0], [0], [1], [0, 0, 1, 1], [], []>} : vector<128x128xbf16>, vector<128x128xbf16>, vector<128x128xf32> -> vector<128x128xf32>
    %37 = vector.broadcast %1 : vector<128x1xf32> to vector<128x128xf32>
    %38 = arith.mulf %36, %37 : vector<128x128xf32>
    %c0_21 = arith.constant 0 : index
    %c0_22 = arith.constant 0 : index
    %39 = vector.load %arg8[%c0_21, %c0_22] : memref<1x128xf32, #tpu.memory_space<vmem>>, vector<1x128xf32>
    %40 = vector.broadcast %39 : vector<1x128xf32> to vector<128x128xf32>
    %41 = arith.addf %38, %40 : vector<128x128xf32>
    %cst_23 = arith.constant 0.000000e+00 : f32
    %42 = vector.broadcast %cst_23 : f32 to vector<128x128xf32>
    %43 = arith.maximumf %41, %42 : vector<128x128xf32>
    %44 = arith.truncf %43 : vector<128x128xf32> to vector<128x128xbf16>
    %c0_24 = arith.constant 0 : index
    %c0_25 = arith.constant 0 : index
    %45 = vector.load %arg9[%c0_24, %c0_25] : memref<128x64xbf16, #tpu.memory_space<vmem>>, vector<128x64xbf16>
    %cst_26 = arith.constant dense<0.000000e+00> : vector<128x64xf32>
    %46 = tpu.matmul %44, %45, %cst_26 {dimension_numbers = #tpu.dot_dimension_numbers<[1], [0], [0], [1], [0, 0, 1, 1], [], []>} : vector<128x128xbf16>, vector<128x64xbf16>, vector<128x64xf32> -> vector<128x64xf32>
    %47 = vector.broadcast %1 : vector<128x1xf32> to vector<128x64xf32>
    %48 = arith.mulf %46, %47 : vector<128x64xf32>
    %49 = arith.truncf %48 : vector<128x64xf32> to vector<128x64xbf16>
    %cst_27 = arith.constant dense<0.000000e+00> : vector<128x64xf32>
    %50 = tpu.matmul %0, %49, %cst_27 {dimension_numbers = #tpu.dot_dimension_numbers<[1], [0], [0], [1], [0, 0, 1, 1], [], []>} : vector<128x128xbf16>, vector<128x64xbf16>, vector<128x64xf32> -> vector<128x64xf32>
    %51 = vector.broadcast %1 : vector<128x1xf32> to vector<128x64xf32>
    %52 = arith.mulf %50, %51 : vector<128x64xf32>
    %c0_28 = arith.constant 0 : index
    %c0_29 = arith.constant 0 : index
    %53 = vector.load %arg10[%c0_28, %c0_29] : memref<1x64xf32, #tpu.memory_space<vmem>>, vector<1x64xf32>
    %54 = vector.broadcast %53 : vector<1x64xf32> to vector<128x64xf32>
    %55 = arith.addf %52, %54 : vector<128x64xf32>
    %cst_30 = arith.constant 0.000000e+00 : f32
    %56 = vector.broadcast %cst_30 : f32 to vector<128x64xf32>
    %57 = arith.maximumf %55, %56 : vector<128x64xf32>
    %58 = arith.truncf %57 : vector<128x64xf32> to vector<128x64xbf16>
    %c0_31 = arith.constant 0 : index
    %c0_32 = arith.constant 0 : index
    %59 = vector.load %arg11[%c0_31, %c0_32] : memref<64x32xbf16, #tpu.memory_space<vmem>>, vector<64x32xbf16>
    %cst_33 = arith.constant dense<0.000000e+00> : vector<128x32xf32>
    %60 = tpu.matmul %58, %59, %cst_33 {dimension_numbers = #tpu.dot_dimension_numbers<[1], [0], [0], [1], [0, 0, 1, 1], [], []>} : vector<128x64xbf16>, vector<64x32xbf16>, vector<128x32xf32> -> vector<128x32xf32>
    %61 = vector.broadcast %1 : vector<128x1xf32> to vector<128x32xf32>
    %62 = arith.mulf %60, %61 : vector<128x32xf32>
    %63 = arith.truncf %62 : vector<128x32xf32> to vector<128x32xbf16>
    %cst_34 = arith.constant dense<0.000000e+00> : vector<128x32xf32>
    %64 = tpu.matmul %0, %63, %cst_34 {dimension_numbers = #tpu.dot_dimension_numbers<[1], [0], [0], [1], [0, 0, 1, 1], [], []>} : vector<128x128xbf16>, vector<128x32xbf16>, vector<128x32xf32> -> vector<128x32xf32>
    %65 = vector.broadcast %1 : vector<128x1xf32> to vector<128x32xf32>
    %66 = arith.mulf %64, %65 : vector<128x32xf32>
    %c0_35 = arith.constant 0 : index
    %c0_36 = arith.constant 0 : index
    %67 = vector.load %arg12[%c0_35, %c0_36] : memref<1x32xf32, #tpu.memory_space<vmem>>, vector<1x32xf32>
    %68 = vector.broadcast %67 : vector<1x32xf32> to vector<128x32xf32>
    %69 = arith.addf %66, %68 : vector<128x32xf32>
    %cst_37 = arith.constant 0.000000e+00 : f32
    %70 = vector.broadcast %cst_37 : f32 to vector<128x32xf32>
    %71 = arith.maximumf %69, %70 : vector<128x32xf32>
    %72 = arith.truncf %71 : vector<128x32xf32> to vector<128x32xbf16>
    %c0_38 = arith.constant 0 : index
    %c0_39 = arith.constant 0 : index
    %73 = vector.load %arg13[%c0_38, %c0_39] : memref<32x128xbf16, #tpu.memory_space<vmem>>, vector<32x128xbf16>
    %cst_40 = arith.constant dense<0.000000e+00> : vector<128x128xf32>
    %74 = tpu.matmul %72, %73, %cst_40 {dimension_numbers = #tpu.dot_dimension_numbers<[1], [0], [0], [1], [0, 0, 1, 1], [], []>} : vector<128x32xbf16>, vector<32x128xbf16>, vector<128x128xf32> -> vector<128x128xf32>
    %75 = vector.broadcast %1 : vector<128x1xf32> to vector<128x128xf32>
    %76 = arith.mulf %74, %75 : vector<128x128xf32>
    %77 = arith.truncf %76 : vector<128x128xf32> to vector<128x128xbf16>
    %cst_41 = arith.constant dense<0.000000e+00> : vector<128x128xf32>
    %78 = tpu.matmul %0, %77, %cst_41 {dimension_numbers = #tpu.dot_dimension_numbers<[1], [0], [0], [1], [0, 0, 1, 1], [], []>} : vector<128x128xbf16>, vector<128x128xbf16>, vector<128x128xf32> -> vector<128x128xf32>
    %79 = vector.broadcast %1 : vector<128x1xf32> to vector<128x128xf32>
    %80 = arith.mulf %78, %79 : vector<128x128xf32>
    %c0_42 = arith.constant 0 : index
    %c0_43 = arith.constant 0 : index
    %81 = vector.load %arg14[%c0_42, %c0_43] : memref<1x128xf32, #tpu.memory_space<vmem>>, vector<1x128xf32>
    %82 = vector.broadcast %81 : vector<1x128xf32> to vector<128x128xf32>
    %83 = arith.addf %80, %82 : vector<128x128xf32>
    %c0_44 = arith.constant 0 : index
    %c0_45 = arith.constant 0 : index
    %84 = vector.load %arg15[%c0_44, %c0_45] : memref<128x128xf32, #tpu.memory_space<vmem>>, vector<128x128xf32>
    tpu.vector_store %arg15[%c0_44, %c0_45], %83 {strides = array<i32>} : memref<128x128xf32, #tpu.memory_space<vmem>>, vector<128x128xf32>,
    return
  }
}

</mosaic_0001>

<llo_original>
// kernel: _forward_from_graph.1
$region0: #{_forward_from_graph.1}
  #allocation0 [shape = 'u32[]', space=smem, size = 0x4, offset = 0x4, fixed_abs, tag = 'smem constant byte address 0x4 - core index']
  #allocation1 [shape = 'u32[72,128]{1,0:T(1,128)}', space=vmem, size = 0x9000, scoped, tag = 'internal scratch']
  %s0 = inlined_call_operand.vmem [shape: bf16[128,128], index: 0, kind: input, shape index: {}]
  %s1 = inlined_call_operand.vmem [shape: f32[128,1], index: 1, kind: input, shape index: {}]
  %s2 = inlined_call_operand.vmem [shape: f32[128,1], index: 2, kind: input, shape index: {}]
  %s3 = inlined_call_operand.vmem [shape: f32[1,256], index: 3, kind: input, shape index: {}]
  %s4 = inlined_call_operand.vmem [shape: f32[1,256], index: 4, kind: input, shape index: {}]
  %s5 = inlined_call_operand.vmem [shape: bf16[256,256], index: 5, kind: input, shape index: {}]
  %s6 = inlined_call_operand.vmem [shape: f32[1,256], index: 6, kind: input, shape index: {}]
  %s7 = inlined_call_operand.vmem [shape: bf16[256,128], index: 7, kind: input, shape index: {}]
  %s8 = inlined_call_operand.vmem [shape: f32[1,128], index: 8, kind: input, shape index: {}]
  %s9 = inlined_call_operand.vmem [shape: bf16[128,64], index: 9, kind: input, shape index: {}]
  %s10 = inlined_call_operand.vmem [shape: f32[1,64], index: 10, kind: input, shape index: {}]
  %s11 = inlined_call_operand.vmem [shape: bf16[64,32], index: 11, kind: input, shape index: {}]
  %s12 = inlined_call_operand.vmem [shape: f32[1,32], index: 12, kind: input, shape index: {}]
  %s13 = inlined_call_operand.vmem [shape: bf16[32,128], index: 13, kind: input, shape index: {}]
  %s14 = inlined_call_operand.vmem [shape: f32[1,128], index: 14, kind: input, shape index: {}]
  %s15 = inlined_call_operand.vmem [shape: f32[128,128], index: 15, kind: output, shape index: {}]
  %s16 = sld [smem:[#allocation0]]
  $region70: #{_forward_from_graph.1} parent=0
    _
  %s18 = ssub.s32 1, %s16
  %s19 = scalar_select 0, %s18, %s16
  // Predicated region
  $region2: #{_forward_from_graph.1} parent=0 // pred_check
    _
  $region3: #{_forward_from_graph.1} parent=0 // pred_check_branch
    %21 = sbr.rel (0) target = $region5
  $region4: #{_forward_from_graph.1} parent=0 // pred_region
    _
  $region5: #{_forward_from_graph.1} parent=0 // pred_fallthru
    _
  // Predicated region
  $region6: #{_forward_from_graph.1} parent=0 // pred_check
    _
  $region7: #{_forward_from_graph.1} parent=0 // pred_check_branch
    %23 = sbr.rel (0) target = $region9
  $region8: #{_forward_from_graph.1} parent=0 // pred_region
    _
  $region9: #{_forward_from_graph.1} parent=0 // pred_fallthru
    _
  // Predicated region
  $region10: #{_forward_from_graph.1} parent=0 // pred_check
    _
  $region11: #{_forward_from_graph.1} parent=0 // pred_check_branch
    %25 = sbr.rel (0) target = $region13
  $region12: #{_forward_from_graph.1} parent=0 // pred_region
    _
  $region13: #{_forward_from_graph.1} parent=0 // pred_fallthru
    _
  // Predicated region
  $region14: #{_forward_from_graph.1} parent=0 // pred_check
    _
  $region15: #{_forward_from_graph.1} parent=0 // pred_check_branch
    %27 = sbr.rel (0) target = $region17
  $region16: #{_forward_from_graph.1} parent=0 // pred_region
    _
  $region17: #{_forward_from_graph.1} parent=0 // pred_fallthru
    _
  // Predicated region
  $region18: #{_forward_from_graph.1} parent=0 // pred_check
    _
  $region19: #{_forward_from_graph.1} parent=0 // pred_check_branch
    %29 = sbr.rel (0) target = $region21
  $region20: #{_forward_from_graph.1} parent=0 // pred_region
    _
  $region21: #{_forward_from_graph.1} parent=0 // pred_fallthru
    _
  // Predicated region
  $region22: #{_forward_from_graph.1} parent=0 // pred_check
    _
  $region23: #{_forward_from_graph.1} parent=0 // pred_check_branch
    %31 = sbr.rel (0) target = $region25
  $region24: #{_forward_from_graph.1} parent=0 // pred_region
    _
  $region25: #{_forward_from_graph.1} parent=0 // pred_fallthru
    _
  // Predicated region
  $region26: #{_forward_from_graph.1} parent=0 // pred_check
    _
  $region27: #{_forward_from_graph.1} parent=0 // pred_check_branch
    %33 = sbr.rel (0) target = $region29
  $region28: #{_forward_from_graph.1} parent=0 // pred_region
    _
  $region29: #{_forward_from_graph.1} parent=0 // pred_fallthru
    _
  // Predicated region
  $region30: #{_forward_from_graph.1} parent=0 // pred_check
    _
  $region31: #{_forward_from_graph.1} parent=0 // pred_check_branch
    %35 = sbr.rel (0) target = $region33
  $region32: #{_forward_from_graph.1} parent=0 // pred_region
    _
  $region33: #{_forward_from_graph.1} parent=0 // pred_fallthru
    _
  // Predicated region
  $region34: #{_forward_from_graph.1} parent=0 // pred_check
    _
  $region35: #{_forward_from_graph.1} parent=0 // pred_check_branch
    %37 = sbr.rel (0) target = $region37
  $region36: #{_forward_from_graph.1} parent=0 // pred_region
    _
  $region37: #{_forward_from_graph.1} parent=0 // pred_fallthru
    _
  // Predicated region
  $region38: #{_forward_from_graph.1} parent=0 // pred_check
    _
  $region39: #{_forward_from_graph.1} parent=0 // pred_check_branch
    %39 = sbr.rel (0) target = $region41
  $region40: #{_forward_from_graph.1} parent=0 // pred_region
    _
  $region41: #{_forward_from_graph.1} parent=0 // pred_fallthru
    _
  // Predicated region
  $region42: #{_forward_from_graph.1} parent=0 // pred_check
    _
  $region43: #{_forward_from_graph.1} parent=0 // pred_check_branch
    %41 = sbr.rel (0) target = $region45
  $region44: #{_forward_from_graph.1} parent=0 // pred_region
    _
  $region45: #{_forward_from_graph.1} parent=0 // pred_fallthru
    _
  // Predicated region
  $region46: #{_forward_from_graph.1} parent=0 // pred_check
    _
  $region47: #{_forward_from_graph.1} parent=0 // pred_check_branch
    %43 = sbr.rel (0) target = $region49
  $region48: #{_forward_from_graph.1} parent=0 // pred_region
    _
  $region49: #{_forward_from_graph.1} parent=0 // pred_fallthru
    _
  // Predicated region
  $region50: #{_forward_from_graph.1} parent=0 // pred_check
    _
  $region51: #{_forward_from_graph.1} parent=0 // pred_check_branch
    %45 = sbr.rel (0) target = $region53
  $region52: #{_forward_from_graph.1} parent=0 // pred_region
    _
  $region53: #{_forward_from_graph.1} parent=0 // pred_fallthru
    _
  // Predicated region
  $region54: #{_forward_from_graph.1} parent=0 // pred_check
    _
  $region55: #{_forward_from_graph.1} parent=0 // pred_check_branch
    %47 = sbr.rel (0) target = $region57
  $region56: #{_forward_from_graph.1} parent=0 // pred_region
    _
  $region57: #{_forward_from_graph.1} parent=0 // pred_fallthru
    _
  // Predicated region
  $region58: #{_forward_from_graph.1} parent=0 // pred_check
    _
  $region59: #{_forward_from_graph.1} parent=0 // pred_check_branch
    %49 = sbr.rel (0) target = $region61
  $region60: #{_forward_from_graph.1} parent=0 // pred_region
    _
  $region61: #{_forward_from_graph.1} parent=0 // pred_fallthru
    _
  %v51 = vld [vmem:[%s0] sm:$0xf]
  %v52 = vld [vmem:[%s0 + $0x4] sm:$0xf]
  %v53 = vld [vmem:[%s0 + $0x8] sm:$0xf]
  %v54 = vld [vmem:[%s0 + $0xc] sm:$0xf]
  %v55 = vld [vmem:[%s0 + $0x10] sm:$0xf]
  %v56 = vld [vmem:[%s0 + $0x14] sm:$0xf]
  %v57 = vld [vmem:[%s0 + $0x18] sm:$0xf]
  %v58 = vld [vmem:[%s0 + $0x1c] sm:$0xf]
  %v59 = vld [vmem:[%s0 + $0x20] sm:$0xf]
  %v60 = vld [vmem:[%s0 + $0x24] sm:$0xf]
  %v61 = vld [vmem:[%s0 + $0x28] sm:$0xf]
  %v62 = vld [vmem:[%s0 + $0x2c] sm:$0xf]
  %v63 = vld [vmem:[%s0 + $0x30] sm:$0xf]
  %v64 = vld [vmem:[%s0 + $0x34] sm:$0xf]
  %v65 = vld [vmem:[%s0 + $0x38] sm:$0xf]
  %v66 = vld [vmem:[%s0 + $0x3c] sm:$0xf]
  %v67 = vld [vmem:[%s2] sm:$0xff]
  %v68 = vld [vmem:[%s2 + $0x8] sm:$0xff]
  %v69 = vld [vmem:[%s2 + $0x10] sm:$0xff]
  %v70 = vld [vmem:[%s2 + $0x18] sm:$0xff]
  %v71 = vld [vmem:[%s2 + $0x20] sm:$0xff]
  %v72 = vld [vmem:[%s2 + $0x28] sm:$0xff]
  %v73 = vld [vmem:[%s2 + $0x30] sm:$0xff]
  %v74 = vld [vmem:[%s2 + $0x38] sm:$0xff]
  %v75 = vld [vmem:[%s2 + $0x40] sm:$0xff]
  %v76 = vld [vmem:[%s2 + $0x48] sm:$0xff]
  %v77 = vld [vmem:[%s2 + $0x50] sm:$0xff]
  %v78 = vld [vmem:[%s2 + $0x58] sm:$0xff]
  %v79 = vld [vmem:[%s2 + $0x60] sm:$0xff]
  %v80 = vld [vmem:[%s2 + $0x68] sm:$0xff]
  %v81 = vld [vmem:[%s2 + $0x70] sm:$0xff]
  %v82 = vld [vmem:[%s2 + $0x78] sm:$0xff]
  %v83 = vld [vmem:[%s1] sm:$0xff]
  %v84 = vld [vmem:[%s1 + $0x8] sm:$0xff]
  %v85 = vld [vmem:[%s1 + $0x10] sm:$0xff]
  %v86 = vld [vmem:[%s1 + $0x18] sm:$0xff]
  %v87 = vld [vmem:[%s1 + $0x20] sm:$0xff]
  %v88 = vld [vmem:[%s1 + $0x28] sm:$0xff]
  %v89 = vld [vmem:[%s1 + $0x30] sm:$0xff]
  %v90 = vld [vmem:[%s1 + $0x38] sm:$0xff]
  %v91 = vld [vmem:[%s1 + $0x40] sm:$0xff]
  %v92 = vld [vmem:[%s1 + $0x48] sm:$0xff]
  %v93 = vld [vmem:[%s1 + $0x50] sm:$0xff]
  %v94 = vld [vmem:[%s1 + $0x58] sm:$0xff]
  %v95 = vld [vmem:[%s1 + $0x60] sm:$0xff]
  %v96 = vld [vmem:[%s1 + $0x68] sm:$0xff]
  %v97 = vld [vmem:[%s1 + $0x70] sm:$0xff]
  %v98 = vld [vmem:[%s1 + $0x78] sm:$0xff]
  %v99 = vmul.f32 %v83, %v67
  %v100 = vmul.f32 %v84, %v68
  %v101 = vmul.f32 %v85, %v69
  %v102 = vmul.f32 %v86, %v70
  %v103 = vmul.f32 %v87, %v71
  %v104 = vmul.f32 %v88, %v72
  %v105 = vmul.f32 %v89, %v73
  %v106 = vmul.f32 %v90, %v74
  %v107 = vmul.f32 %v91, %v75
  %v108 = vmul.f32 %v92, %v76
  %v109 = vmul.f32 %v93, %v77
  %v110 = vmul.f32 %v94, %v78
  %v111 = vmul.f32 %v95, %v79
  %v112 = vmul.f32 %v96, %v80
  %v113 = vmul.f32 %v97, %v81
  %v114 = vmul.f32 %v98, %v82
  %v115 = vpack.c.bf16 %v100, %v99
  %v116 = vpack.c.bf16 %v102, %v101
  %v117 = vpack.c.bf16 %v104, %v103
  %v118 = vpack.c.bf16 %v106, %v105
  %v119 = vpack.c.bf16 %v108, %v107
  %v120 = vpack.c.bf16 %v110, %v109
  %v121 = vpack.c.bf16 %v112, %v111
  %v122 = vpack.c.bf16 %v114, %v113
  %v139 = vunpack.c.l.b16 %v51
  %v140 = vunpack.c.l.b16 %v52
  %v141 = vunpack.c.l.b16 %v53
  %v142 = vunpack.c.l.b16 %v54
  %v143 = vunpack.c.l.b16 %v55
  %v144 = vunpack.c.l.b16 %v56
  %v145 = vunpack.c.l.b16 %v57
  %v146 = vunpack.c.l.b16 %v58
  %v147 = vunpack.c.l.b16 %v59
  %v148 = vunpack.c.l.b16 %v60
  %v149 = vunpack.c.l.b16 %v61
  %v150 = vunpack.c.l.b16 %v62
  %v151 = vunpack.c.l.b16 %v63
  %v152 = vunpack.c.l.b16 %v64
  %v153 = vunpack.c.l.b16 %v65
  %v154 = vunpack.c.l.b16 %v66
  %v155 = vpack.c.b16 %v140, %v139
  %v156 = vpack.c.b16 %v142, %v141
  %v157 = vpack.c.b16 %v144, %v143
  %v158 = vpack.c.b16 %v146, %v145
  %v159 = vpack.c.b16 %v148, %v147
  %v160 = vpack.c.b16 %v150, %v149
  %v161 = vpack.c.b16 %v152, %v151
  %v162 = vpack.c.b16 %v154, %v153
  %171 = vmatpush.bf16.msra.mxu0 %v122
  %172 = vmatpush.bf16.msra.mxu0 %v121
  %173 = vmatpush.bf16.msra.mxu0 %v120
  %174 = vmatpush.bf16.msra.mxu0 %v119
  %175 = vmatpush.bf16.msra.mxu0 %v118
  %176 = vmatpush.bf16.msra.mxu0 %v117
  %177 = vmatpush.bf16.msra.mxu0 %v116
  %178 = vmatpush.bf16.msra.mxu0 %v115
  %179 = vmatmul.bf16.gmra.mxu0 %v155
  %v180 = vpop.f32.mrf.mxu0
  %v181 = vadd.f32 0.0, %v180
  %v182 = vpop.f32.mrf.mxu0
  %v183 = vadd.f32 0.0, %v182
  %184 = vmatmul.bf16.gmra.mxu0 %v156
  %v185 = vpop.f32.mrf.mxu0
  %v186 = vadd.f32 0.0, %v185
  %v187 = vpop.f32.mrf.mxu0
  %v188 = vadd.f32 0.0, %v187
  %189 = vmatmul.bf16.gmra.mxu0 %v157
  %v190 = vpop.f32.mrf.mxu0
  %v191 = vadd.f32 0.0, %v190
  %v192 = vpop.f32.mrf.mxu0
  %v193 = vadd.f32 0.0, %v192
  %194 = vmatmul.bf16.gmra.mxu0 %v158
  %v195 = vpop.f32.mrf.mxu0
  %v196 = vadd.f32 0.0, %v195
  %v197 = vpop.f32.mrf.mxu0
  %v198 = vadd.f32 0.0, %v197
  %199 = vmatmul.bf16.gmra.mxu0 %v159
  %v200 = vpop.f32.mrf.mxu0
  %v201 = vadd.f32 0.0, %v200
  %v202 = vpop.f32.mrf.mxu0
  %v203 = vadd.f32 0.0, %v202
  %204 = vmatmul.bf16.gmra.mxu0 %v160
  %v205 = vpop.f32.mrf.mxu0
  %v206 = vadd.f32 0.0, %v205
  %v207 = vpop.f32.mrf.mxu0
  %v208 = vadd.f32 0.0, %v207
  %209 = vmatmul.bf16.gmra.mxu0 %v161
  %v210 = vpop.f32.mrf.mxu0
  %v211 = vadd.f32 0.0, %v210
  %v212 = vpop.f32.mrf.mxu0
  %v213 = vadd.f32 0.0, %v212
  %214 = vmatmul.bf16.gmra.mxu0 %v162
  %v215 = vpop.f32.mrf.mxu0
  %v216 = vadd.f32 0.0, %v215
  %v217 = vpop.f32.mrf.mxu0
  %v218 = vadd.f32 0.0, %v217
  %219 = vdwg.mxu0
  %v220 = vmul.f32 %v181, %v67
  %v221 = vmul.f32 %v183, %v68
  %v222 = vmul.f32 %v186, %v69
  %v223 = vmul.f32 %v188, %v70
  %v224 = vmul.f32 %v191, %v71
  %v225 = vmul.f32 %v193, %v72
  %v226 = vmul.f32 %v196, %v73
  %v227 = vmul.f32 %v198, %v74
  %v228 = vmul.f32 %v201, %v75
  %v229 = vmul.f32 %v203, %v76
  %v230 = vmul.f32 %v206, %v77
  %v231 = vmul.f32 %v208, %v78
  %v232 = vmul.f32 %v211, %v79
  %v233 = vmul.f32 %v213, %v80
  %v234 = vmul.f32 %v216, %v81
  %v235 = vmul.f32 %v218, %v82
  %v236 = vld [vmem:[%s3] sm:$0x3]
  %238 = vset.pattern.permute.xlu0 0
  %239 = vperm.xlu0 %238, %v220
  %v240 = vpop.permute.xlu0 %239
  %243 = vset.pattern.permute.xlu0 0
  %244 = vperm.xlu0 %243, %v221
  %v245 = vpop.permute.xlu0 %244
  %248 = vset.pattern.permute.xlu0 0
  %249 = vperm.xlu0 %248, %v222
  %v250 = vpop.permute.xlu0 %249
  %253 = vset.pattern.permute.xlu0 0
  %254 = vperm.xlu0 %253, %v223
  %v255 = vpop.permute.xlu0 %254
  %258 = vset.pattern.permute.xlu0 0
  %259 = vperm.xlu0 %258, %v224
  %v260 = vpop.permute.xlu0 %259
  %263 = vset.pattern.permute.xlu0 0
  %264 = vperm.xlu0 %263, %v225
  %v265 = vpop.permute.xlu0 %264
  %268 = vset.pattern.permute.xlu0 0
  %269 = vperm.xlu0 %268, %v226
  %v270 = vpop.permute.xlu0 %269
  %273 = vset.pattern.permute.xlu0 0
  %274 = vperm.xlu0 %273, %v227
  %v275 = vpop.permute.xlu0 %274
  %278 = vset.pattern.permute.xlu0 0
  %279 = vperm.xlu0 %278, %v228
  %v280 = vpop.permute.xlu0 %279
  %283 = vset.pattern.permute.xlu0 0
  %284 = vperm.xlu0 %283, %v229
  %v285 = vpop.permute.xlu0 %284
  %288 = vset.pattern.permute.xlu0 0
  %289 = vperm.xlu0 %288, %v230
  %v290 = vpop.permute.xlu0 %289
  %293 = vset.pattern.permute.xlu0 0
  %294 = vperm.xlu0 %293, %v231
  %v295 = vpop.permute.xlu0 %294
  %298 = vset.pattern.permute.xlu0 0
  %299 = vperm.xlu0 %298, %v232
  %v300 = vpop.permute.xlu0 %299
  %303 = vset.pattern.permute.xlu0 0
  %304 = vperm.xlu0 %303, %v233
  %v305 = vpop.permute.xlu0 %304
  %308 = vset.pattern.permute.xlu0 0
  %309 = vperm.xlu0 %308, %v234
  %v310 = vpop.permute.xlu0 %309
  %313 = vset.pattern.permute.xlu0 0
  %314 = vperm.xlu0 %313, %v235
  %v315 = vpop.permute.xlu0 %314
  %v318 = vperm.slane %v236, 0
  %v319 = vperm.slane %v236, 1
  %v322 = vmul.f32 %v240, %v318
  %v323 = vmul.f32 %v240, %v319
  %v324 = vmul.f32 %v245, %v318
  %v325 = vmul.f32 %v245, %v319
  %v326 = vmul.f32 %v250, %v318
  %v327 = vmul.f32 %v250, %v319
  %v328 = vmul.f32 %v255, %v318
  %v329 = vmul.f32 %v255, %v319
  %v330 = vmul.f32 %v260, %v318
  %v331 = vmul.f32 %v260, %v319
  %v332 = vmul.f32 %v265, %v318
  %v333 = vmul.f32 %v265, %v319
  %v334 = vmul.f32 %v270, %v318
  %v335 = vmul.f32 %v270, %v319
  %v336 = vmul.f32 %v275, %v318
  %v337 = vmul.f32 %v275, %v319
  %v338 = vmul.f32 %v280, %v318
  %v339 = vmul.f32 %v280, %v319
  %v340 = vmul.f32 %v285, %v318
  %v341 = vmul.f32 %v285, %v319
  %v342 = vmul.f32 %v290, %v318
  %v343 = vmul.f32 %v290, %v319
  %v344 = vmul.f32 %v295, %v318
  %v345 = vmul.f32 %v295, %v319
  %v346 = vmul.f32 %v300, %v318
  %v347 = vmul.f32 %v300, %v319
  %v348 = vmul.f32 %v305, %v318
  %v349 = vmul.f32 %v305, %v319
  %v350 = vmul.f32 %v310, %v318
  %v351 = vmul.f32 %v310, %v319
  %v352 = vmul.f32 %v315, %v318
  %v353 = vmul.f32 %v315, %v319
  %v354 = vld [vmem:[%s4] sm:$0x3]
  %v356 = vperm.slane %v354, 0
  %v357 = vperm.slane %v354, 1
  %v360 = vadd.f32 %v322, %v356
  %v361 = vadd.f32 %v323, %v357
  %v362 = vadd.f32 %v324, %v356
  %v363 = vadd.f32 %v325, %v357
  %v364 = vadd.f32 %v326, %v356
  %v365 = vadd.f32 %v327, %v357
  %v366 = vadd.f32 %v328, %v356
  %v367 = vadd.f32 %v329, %v357
  %v368 = vadd.f32 %v330, %v356
  %v369 = vadd.f32 %v331, %v357
  %v370 = vadd.f32 %v332, %v356
  %v371 = vadd.f32 %v333, %v357
  %v372 = vadd.f32 %v334, %v356
  %v373 = vadd.f32 %v335, %v357
  %v374 = vadd.f32 %v336, %v356
  %v375 = vadd.f32 %v337, %v357
  %v376 = vadd.f32 %v338, %v356
  %v377 = vadd.f32 %v339, %v357
  %v378 = vadd.f32 %v340, %v356
  %v379 = vadd.f32 %v341, %v357
  %v380 = vadd.f32 %v342, %v356
  %v381 = vadd.f32 %v343, %v357
  %v382 = vadd.f32 %v344, %v356
  %v383 = vadd.f32 %v345, %v357
  %v384 = vadd.f32 %v346, %v356
  %v385 = vadd.f32 %v347, %v357
  %v386 = vadd.f32 %v348, %v356
  %v387 = vadd.f32 %v349, %v357
  %v388 = vadd.f32 %v350, %v356
  %v389 = vadd.f32 %v351, %v357
  %v390 = vadd.f32 %v352, %v356
  %v391 = vadd.f32 %v353, %v357
  %v392 = vmax.f32 %v360, 0.0
  %v393 = vmax.f32 %v361, 0.0
  %v394 = vmax.f32 %v362, 0.0
  %v395 = vmax.f32 %v363, 0.0
  %v396 = vmax.f32 %v364, 0.0
  %v397 = vmax.f32 %v365, 0.0
  %v398 = vmax.f32 %v366, 0.0
  %v399 = vmax.f32 %v367, 0.0
  %v400 = vmax.f32 %v368, 0.0
  %v401 = vmax.f32 %v369, 0.0
  %v402 = vmax.f32 %v370, 0.0
  %v403 = vmax.f32 %v371, 0.0
  %v404 = vmax.f32 %v372, 0.0
  %v405 = vmax.f32 %v373, 0.0
  %v406 = vmax.f32 %v374, 0.0
  %v407 = vmax.f32 %v375, 0.0
  %v408 = vmax.f32 %v376, 0.0
  %v409 = vmax.f32 %v377, 0.0
  %v410 = vmax.f32 %v378, 0.0
  %v411 = vmax.f32 %v379, 0.0
  %v412 = vmax.f32 %v380, 0.0
  %v413 = vmax.f32 %v381, 0.0
  %v414 = vmax.f32 %v382, 0.0
  %v415 = vmax.f32 %v383, 0.0
  %v416 = vmax.f32 %v384, 0.0
  %v417 = vmax.f32 %v385, 0.0
  %v418 = vmax.f32 %v386, 0.0
  %v419 = vmax.f32 %v387, 0.0
  %v420 = vmax.f32 %v388, 0.0
  %v421 = vmax.f32 %v389, 0.0
  %v422 = vmax.f32 %v390, 0.0
  %v423 = vmax.f32 %v391, 0.0
  %v424 = vpack.c.bf16 %v394, %v392
  %v425 = vpack.c.bf16 %v395, %v393
  %v426 = vpack.c.bf16 %v398, %v396
  %v427 = vpack.c.bf16 %v399, %v397
  %v428 = vpack.c.bf16 %v402, %v400
  %v429 = vpack.c.bf16 %v403, %v401
  %v430 = vpack.c.bf16 %v406, %v404
  %v431 = vpack.c.bf16 %v407, %v405
  %v432 = vpack.c.bf16 %v410, %v408
  %v433 = vpack.c.bf16 %v411, %v409
  %v434 = vpack.c.bf16 %v414, %v412
  %v435 = vpack.c.bf16 %v415, %v413
  %v436 = vpack.c.bf16 %v418, %v416
  %v437 = vpack.c.bf16 %v419, %v417
  %v438 = vpack.c.bf16 %v422, %v420
  %v439 = vpack.c.bf16 %v423, %v421
  %v440 = vld [vmem:[%s5] sm:$0xff]
  %v441 = vld [vmem:[%s5 + $0x8] sm:$0xff]
  %v442 = vld [vmem:[%s5 + $0x10] sm:$0xff]
  %v443 = vld [vmem:[%s5 + $0x18] sm:$0xff]
  %v444 = vld [vmem:[%s5 + $0x20] sm:$0xff]
  %v445 = vld [vmem:[%s5 + $0x28] sm:$0xff]
  %v446 = vld [vmem:[%s5 + $0x30] sm:$0xff]
  %v447 = vld [vmem:[%s5 + $0x38] sm:$0xff]
  %v448 = vld [vmem:[%s5 + $0x40] sm:$0xff]
  %v449 = vld [vmem:[%s5 + $0x48] sm:$0xff]
  %v450 = vld [vmem:[%s5 + $0x50] sm:$0xff]
  %v451 = vld [vmem:[%s5 + $0x58] sm:$0xff]
  %v452 = vld [vmem:[%s5 + $0x60] sm:$0xff]
  %v453 = vld [vmem:[%s5 + $0x68] sm:$0xff]
  %v454 = vld [vmem:[%s5 + $0x70] sm:$0xff]
  %v455 = vld [vmem:[%s5 + $0x78] sm:$0xff]
  %v456 = vld [vmem:[%s5 + $0x80] sm:$0xff]
  %v457 = vld [vmem:[%s5 + $0x88] sm:$0xff]
  %v458 = vld [vmem:[%s5 + $0x90] sm:$0xff]
  %v459 = vld [vmem:[%s5 + $0x98] sm:$0xff]
  %v460 = vld [vmem:[%s5 + $0xa0] sm:$0xff]
  %v461 = vld [vmem:[%s5 + $0xa8] sm:$0xff]
  %v462 = vld [vmem:[%s5 + $0xb0] sm:$0xff]
  %v463 = vld [vmem:[%s5 + $0xb8] sm:$0xff]
  %v464 = vld [vmem:[%s5 + $0xc0] sm:$0xff]
  %v465 = vld [vmem:[%s5 + $0xc8] sm:$0xff]
  %v466 = vld [vmem:[%s5 + $0xd0] sm:$0xff]
  %v467 = vld [vmem:[%s5 + $0xd8] sm:$0xff]
  %v468 = vld [vmem:[%s5 + $0xe0] sm:$0xff]
  %v469 = vld [vmem:[%s5 + $0xe8] sm:$0xff]
  %v470 = vld [vmem:[%s5 + $0xf0] sm:$0xff]
  %v471 = vld [vmem:[%s5 + $0xf8] sm:$0xff]
  %v504 = vunpack.c.l.b16 %v440
  %v505 = vunpack.c.h.b16 %v440
  %v506 = vunpack.c.l.b16 %v441
  %v507 = vunpack.c.h.b16 %v441
  %v508 = vunpack.c.l.b16 %v442
  %v509 = vunpack.c.h.b16 %v442
  %v510 = vunpack.c.l.b16 %v443
  %v511 = vunpack.c.h.b16 %v443
  %v512 = vunpack.c.l.b16 %v444
  %v513 = vunpack.c.h.b16 %v444
  %v514 = vunpack.c.l.b16 %v445
  %v515 = vunpack.c.h.b16 %v445
  %v516 = vunpack.c.l.b16 %v446
  %v517 = vunpack.c.h.b16 %v446
  %v518 = vunpack.c.l.b16 %v447
  %v519 = vunpack.c.h.b16 %v447
  %v520 = vunpack.c.l.b16 %v448
  %v521 = vunpack.c.h.b16 %v448
  %v522 = vunpack.c.l.b16 %v449
  %v523 = vunpack.c.h.b16 %v449
  %v524 = vunpack.c.l.b16 %v450
  %v525 = vunpack.c.h.b16 %v450
  %v526 = vunpack.c.l.b16 %v451
  %v527 = vunpack.c.h.b16 %v451
  %v528 = vunpack.c.l.b16 %v452
  %v529 = vunpack.c.h.b16 %v452
  %v530 = vunpack.c.l.b16 %v453
  %v531 = vunpack.c.h.b16 %v453
  %v532 = vunpack.c.l.b16 %v454
  %v533 = vunpack.c.h.b16 %v454
  %v534 = vunpack.c.l.b16 %v455
  %v535 = vunpack.c.h.b16 %v455
  %v536 = vunpack.c.l.b16 %v456
  %v537 = vunpack.c.h.b16 %v456
  %v538 = vunpack.c.l.b16 %v457
  %v539 = vunpack.c.h.b16 %v457
  %v540 = vunpack.c.l.b16 %v458
  %v541 = vunpack.c.h.b16 %v458
  %v542 = vunpack.c.l.b16 %v459
  %v543 = vunpack.c.h.b16 %v459
  %v544 = vunpack.c.l.b16 %v460
  %v545 = vunpack.c.h.b16 %v460
  %v546 = vunpack.c.l.b16 %v461
  %v547 = vunpack.c.h.b16 %v461
  %v548 = vunpack.c.l.b16 %v462
  %v549 = vunpack.c.h.b16 %v462
  %v550 = vunpack.c.l.b16 %v463
  %v551 = vunpack.c.h.b16 %v463
  %v552 = vunpack.c.l.b16 %v464
  %v553 = vunpack.c.h.b16 %v464
  %v554 = vunpack.c.l.b16 %v465
  %v555 = vunpack.c.h.b16 %v465
  %v556 = vunpack.c.l.b16 %v466
  %v557 = vunpack.c.h.b16 %v466
  %v558 = vunpack.c.l.b16 %v467
  %v559 = vunpack.c.h.b16 %v467
  %v560 = vunpack.c.l.b16 %v468
  %v561 = vunpack.c.h.b16 %v468
  %v562 = vunpack.c.l.b16 %v469
  %v563 = vunpack.c.h.b16 %v469
  %v564 = vunpack.c.l.b16 %v470
  %v565 = vunpack.c.h.b16 %v470
  %v566 = vunpack.c.l.b16 %v471
  %v567 = vunpack.c.h.b16 %v471
  %v568 = vpack.c.b16 %v506, %v504
  %v569 = vpack.c.b16 %v507, %v505
  %v570 = vpack.c.b16 %v510, %v508
  %v571 = vpack.c.b16 %v511, %v509
  %v572 = vpack.c.b16 %v514, %v512
  %v573 = vpack.c.b16 %v515, %v513
  %v574 = vpack.c.b16 %v518, %v516
  %v575 = vpack.c.b16 %v519, %v517
  %v576 = vpack.c.b16 %v522, %v520
  %v577 = vpack.c.b16 %v523, %v521
  %v578 = vpack.c.b16 %v526, %v524
  %v579 = vpack.c.b16 %v527, %v525
  %v580 = vpack.c.b16 %v530, %v528
  %v581 = vpack.c.b16 %v531, %v529
  %v582 = vpack.c.b16 %v534, %v532
  %v583 = vpack.c.b16 %v535, %v533
  %v584 = vpack.c.b16 %v538, %v536
  %v585 = vpack.c.b16 %v539, %v537
  %v586 = vpack.c.b16 %v542, %v540
  %v587 = vpack.c.b16 %v543, %v541
  %v588 = vpack.c.b16 %v546, %v544
  %v589 = vpack.c.b16 %v547, %v545
  %v590 = vpack.c.b16 %v550, %v548
  %v591 = vpack.c.b16 %v551, %v549
  %v592 = vpack.c.b16 %v554, %v552
  %v593 = vpack.c.b16 %v555, %v553
  %v594 = vpack.c.b16 %v558, %v556
  %v595 = vpack.c.b16 %v559, %v557
  %v596 = vpack.c.b16 %v562, %v560
  %v597 = vpack.c.b16 %v563, %v561
  %v598 = vpack.c.b16 %v566, %v564
  %v599 = vpack.c.b16 %v567, %v565
  %632 = vmatpush.bf16.msra.mxu0 %v582
  %633 = vmatpush.bf16.msra.mxu0 %v580
  %634 = vmatpush.bf16.msra.mxu0 %v578
  %635 = vmatpush.bf16.msra.mxu0 %v576
  %636 = vmatpush.bf16.msra.mxu0 %v574
  %637 = vmatpush.bf16.msra.mxu0 %v572
  %638 = vmatpush.bf16.msra.mxu0 %v570
  %639 = vmatpush.bf16.msra.mxu0 %v568
  %640 = vmatmul.bf16.gmra.mxu0 %v424
  %v641 = vpop.f32.mrf.mxu0
  %v642 = vadd.f32 0.0, %v641
  %v643 = vpop.f32.mrf.mxu0
  %v644 = vadd.f32 0.0, %v643
  %645 = vmatmul.bf16.gmra.mxu0 %v426
  %v646 = vpop.f32.mrf.mxu0
  %v647 = vadd.f32 0.0, %v646
  %v648 = vpop.f32.mrf.mxu0
  %v649 = vadd.f32 0.0, %v648
  %650 = vmatmul.bf16.gmra.mxu0 %v428
  %v651 = vpop.f32.mrf.mxu0
  %v652 = vadd.f32 0.0, %v651
  %v653 = vpop.f32.mrf.mxu0
  %v654 = vadd.f32 0.0, %v653
  %655 = vmatmul.bf16.gmra.mxu0 %v430
  %v656 = vpop.f32.mrf.mxu0
  %v657 = vadd.f32 0.0, %v656
  %v658 = vpop.f32.mrf.mxu0
  %v659 = vadd.f32 0.0, %v658
  %660 = vmatmul.bf16.gmra.mxu0 %v432
  %v661 = vpop.f32.mrf.mxu0
  %v662 = vadd.f32 0.0, %v661
  %v663 = vpop.f32.mrf.mxu0
  %v664 = vadd.f32 0.0, %v663
  %665 = vmatmul.bf16.gmra.mxu0 %v434
  %v666 = vpop.f32.mrf.mxu0
  %v667 = vadd.f32 0.0, %v666
  %v668 = vpop.f32.mrf.mxu0
  %v669 = vadd.f32 0.0, %v668
  %670 = vmatmul.bf16.gmra.mxu0 %v436
  %v671 = vpop.f32.mrf.mxu0
  %v672 = vadd.f32 0.0, %v671
  %v673 = vpop.f32.mrf.mxu0
  %v674 = vadd.f32 0.0, %v673
  %675 = vmatmul.bf16.gmra.mxu0 %v438
  %v676 = vpop.f32.mrf.mxu0
  %v677 = vadd.f32 0.0, %v676
  %v678 = vpop.f32.mrf.mxu0
  %v679 = vadd.f32 0.0, %v678
  %680 = vdwg.mxu0
  %681 = vmatpush.bf16.msra.mxu0 %v598
  %682 = vmatpush.bf16.msra.mxu0 %v596
  %683 = vmatpush.bf16.msra.mxu0 %v594
  %684 = vmatpush.bf16.msra.mxu0 %v592
  %685 = vmatpush.bf16.msra.mxu0 %v590
  %686 = vmatpush.bf16.msra.mxu0 %v588
  %687 = vmatpush.bf16.msra.mxu0 %v586
  %688 = vmatpush.bf16.msra.mxu0 %v584
  %689 = vmatmul.bf16.gmra.mxu0 %v425
  %v690 = vpop.f32.mrf.mxu0
  %v691 = vadd.f32 %v642, %v690
  %v692 = vpop.f32.mrf.mxu0
  %v693 = vadd.f32 %v644, %v692
  %694 = vmatmul.bf16.gmra.mxu0 %v427
  %v695 = vpop.f32.mrf.mxu0
  %v696 = vadd.f32 %v647, %v695
  %v697 = vpop.f32.mrf.mxu0
  %v698 = vadd.f32 %v649, %v697
  %699 = vmatmul.bf16.gmra.mxu0 %v429
  %v700 = vpop.f32.mrf.mxu0
  %v701 = vadd.f32 %v652, %v700
  %v702 = vpop.f32.mrf.mxu0
  %v703 = vadd.f32 %v654, %v702
  %704 = vmatmul.bf16.gmra.mxu0 %v431
  %v705 = vpop.f32.mrf.mxu0
  %v706 = vadd.f32 %v657, %v705
  %v707 = vpop.f32.mrf.mxu0
  %v708 = vadd.f32 %v659, %v707
  %709 = vmatmul.bf16.gmra.mxu0 %v433
  %v710 = vpop.f32.mrf.mxu0
  %v711 = vadd.f32 %v662, %v710
  %v712 = vpop.f32.mrf.mxu0
  %v713 = vadd.f32 %v664, %v712
  %714 = vmatmul.bf16.gmra.mxu0 %v435
  %v715 = vpop.f32.mrf.mxu0
  %v716 = vadd.f32 %v667, %v715
  %v717 = vpop.f32.mrf.mxu0
  %v718 = vadd.f32 %v669, %v717
  %719 = vmatmul.bf16.gmra.mxu0 %v437
  %v720 = vpop.f32.mrf.mxu0
  %v721 = vadd.f32 %v672, %v720
  %v722 = vpop.f32.mrf.mxu0
  %v723 = vadd.f32 %v674, %v722
  %724 = vmatmul.bf16.gmra.mxu0 %v439
  %v725 = vpop.f32.mrf.mxu0
  %v726 = vadd.f32 %v677, %v725
  %v727 = vpop.f32.mrf.mxu0
  %v728 = vadd.f32 %v679, %v727
  %729 = vdwg.mxu0
  %730 = vmatpush.bf16.msra.mxu0 %v583
  %731 = vmatpush.bf16.msra.mxu0 %v581
  %732 = vmatpush.bf16.msra.mxu0 %v579
  %733 = vmatpush.bf16.msra.mxu0 %v577
  %734 = vmatpush.bf16.msra.mxu0 %v575
  %735 = vmatpush.bf16.msra.mxu0 %v573
  %736 = vmatpush.bf16.msra.mxu0 %v571
  %737 = vmatpush.bf16.msra.mxu0 %v569
  %738 = vmatmul.bf16.gmra.mxu0 %v424
  %v739 = vpop.f32.mrf.mxu0
  %v740 = vadd.f32 0.0, %v739
  %v741 = vpop.f32.mrf.mxu0
  %v742 = vadd.f32 0.0, %v741
  %743 = vmatmul.bf16.gmra.mxu0 %v426
  %v744 = vpop.f32.mrf.mxu0
  %v745 = vadd.f32 0.0, %v744
  %v746 = vpop.f32.mrf.mxu0
  %v747 = vadd.f32 0.0, %v746
  %748 = vmatmul.bf16.gmra.mxu0 %v428
  %v749 = vpop.f32.mrf.mxu0
  %v750 = vadd.f32 0.0, %v749
  %v751 = vpop.f32.mrf.mxu0
  %v752 = vadd.f32 0.0, %v751
  %753 = vmatmul.bf16.gmra.mxu0 %v430
  %v754 = vpop.f32.mrf.mxu0
  %v755 = vadd.f32 0.0, %v754
  %v756 = vpop.f32.mrf.mxu0
  %v757 = vadd.f32 0.0, %v756
  %758 = vmatmul.bf16.gmra.mxu0 %v432
  %v759 = vpop.f32.mrf.mxu0
  %v760 = vadd.f32 0.0, %v759
  %v761 = vpop.f32.mrf.mxu0
  %v762 = vadd.f32 0.0, %v761
  %763 = vmatmul.bf16.gmra.mxu0 %v434
  %v764 = vpop.f32.mrf.mxu0
  %v765 = vadd.f32 0.0, %v764
  %v766 = vpop.f32.mrf.mxu0
  %v767 = vadd.f32 0.0, %v766
  %768 = vmatmul.bf16.gmra.mxu0 %v436
  %v769 = vpop.f32.mrf.mxu0
  %v770 = vadd.f32 0.0, %v769
  %v771 = vpop.f32.mrf.mxu0
  %v772 = vadd.f32 0.0, %v771
  %773 = vmatmul.bf16.gmra.mxu0 %v438
  %v774 = vpop.f32.mrf.mxu0
  %v775 = vadd.f32 0.0, %v774
  %v776 = vpop.f32.mrf.mxu0
  %v777 = vadd.f32 0.0, %v776
  %778 = vdwg.mxu0
  %779 = vmatpush.bf16.msra.mxu0 %v599
  %780 = vmatpush.bf16.msra.mxu0 %v597
  %781 = vmatpush.bf16.msra.mxu0 %v595
  %782 = vmatpush.bf16.msra.mxu0 %v593
  %783 = vmatpush.bf16.msra.mxu0 %v591
  %784 = vmatpush.bf16.msra.mxu0 %v589
  %785 = vmatpush.bf16.msra.mxu0 %v587
  %786 = vmatpush.bf16.msra.mxu0 %v585
  %787 = vmatmul.bf16.gmra.mxu0 %v425
  %v788 = vpop.f32.mrf.mxu0
  %v789 = vadd.f32 %v740, %v788
  %v790 = vpop.f32.mrf.mxu0
  %v791 = vadd.f32 %v742, %v790
  %792 = vmatmul.bf16.gmra.mxu0 %v427
  %v793 = vpop.f32.mrf.mxu0
  %v794 = vadd.f32 %v745, %v793
  %v795 = vpop.f32.mrf.mxu0
  %v796 = vadd.f32 %v747, %v795
  %797 = vmatmul.bf16.gmra.mxu0 %v429
  %v798 = vpop.f32.mrf.mxu0
  %v799 = vadd.f32 %v750, %v798
  %v800 = vpop.f32.mrf.mxu0
  %v801 = vadd.f32 %v752, %v800
  %802 = vmatmul.bf16.gmra.mxu0 %v431
  %v803 = vpop.f32.mrf.mxu0
  %v804 = vadd.f32 %v755, %v803
  %v805 = vpop.f32.mrf.mxu0
  %v806 = vadd.f32 %v757, %v805
  %807 = vmatmul.bf16.gmra.mxu0 %v433
  %v808 = vpop.f32.mrf.mxu0
  %v809 = vadd.f32 %v760, %v808
  %v810 = vpop.f32.mrf.mxu0
  %v811 = vadd.f32 %v762, %v810
  %812 = vmatmul.bf16.gmra.mxu0 %v435
  %v813 = vpop.f32.mrf.mxu0
  %v814 = vadd.f32 %v765, %v813
  %v815 = vpop.f32.mrf.mxu0
  %v816 = vadd.f32 %v767, %v815
  %817 = vmatmul.bf16.gmra.mxu0 %v437
  %v818 = vpop.f32.mrf.mxu0
  %v819 = vadd.f32 %v770, %v818
  %v820 = vpop.f32.mrf.mxu0
  %v821 = vadd.f32 %v772, %v820
  %822 = vmatmul.bf16.gmra.mxu0 %v439
  %v823 = vpop.f32.mrf.mxu0
  %v824 = vadd.f32 %v775, %v823
  %v825 = vpop.f32.mrf.mxu0
  %v826 = vadd.f32 %v777, %v825
  %827 = vdwg.mxu0
  %829 = vset.pattern.permute.xlu0 0
  %830 = vperm.xlu0 %829, %v67
  %v831 = vpop.permute.xlu0 %830
  %834 = vset.pattern.permute.xlu0 0
  %835 = vperm.xlu0 %834, %v68
  %v836 = vpop.permute.xlu0 %835
  %839 = vset.pattern.permute.xlu0 0
  %840 = vperm.xlu0 %839, %v69
  %v841 = vpop.permute.xlu0 %840
  %844 = vset.pattern.permute.xlu0 0
  %845 = vperm.xlu0 %844, %v70
  %v846 = vpop.permute.xlu0 %845
  %849 = vset.pattern.permute.xlu0 0
  %850 = vperm.xlu0 %849, %v71
  %v851 = vpop.permute.xlu0 %850
  %854 = vset.pattern.permute.xlu0 0
  %855 = vperm.xlu0 %854, %v72
  %v856 = vpop.permute.xlu0 %855
  %859 = vset.pattern.permute.xlu0 0
  %860 = vperm.xlu0 %859, %v73
  %v861 = vpop.permute.xlu0 %860
  %864 = vset.pattern.permute.xlu0 0
  %865 = vperm.xlu0 %864, %v74
  %v866 = vpop.permute.xlu0 %865
  %869 = vset.pattern.permute.xlu0 0
  %870 = vperm.xlu0 %869, %v75
  %v871 = vpop.permute.xlu0 %870
  %874 = vset.pattern.permute.xlu0 0
  %875 = vperm.xlu0 %874, %v76
  %v876 = vpop.permute.xlu0 %875
  %879 = vset.pattern.permute.xlu0 0
  %880 = vperm.xlu0 %879, %v77
  %v881 = vpop.permute.xlu0 %880
  %884 = vset.pattern.permute.xlu0 0
  %885 = vperm.xlu0 %884, %v78
  %v886 = vpop.permute.xlu0 %885
  %889 = vset.pattern.permute.xlu0 0
  %890 = vperm.xlu0 %889, %v79
  %v891 = vpop.permute.xlu0 %890
  %894 = vset.pattern.permute.xlu0 0
  %895 = vperm.xlu0 %894, %v80
  %v896 = vpop.permute.xlu0 %895
  %899 = vset.pattern.permute.xlu0 0
  %900 = vperm.xlu0 %899, %v81
  %v901 = vpop.permute.xlu0 %900
  %904 = vset.pattern.permute.xlu0 0
  %905 = vperm.xlu0 %904, %v82
  %v906 = vpop.permute.xlu0 %905
  %v908 = vmul.f32 %v691, %v831
  %v909 = vmul.f32 %v789, %v831
  %v910 = vmul.f32 %v693, %v836
  %v911 = vmul.f32 %v791, %v836
  %v912 = vmul.f32 %v696, %v841
  %v913 = vmul.f32 %v794, %v841
  %v914 = vmul.f32 %v698, %v846
  %v915 = vmul.f32 %v796, %v846
  %v916 = vmul.f32 %v701, %v851
  %v917 = vmul.f32 %v799, %v851
  %v918 = vmul.f32 %v703, %v856
  %v919 = vmul.f32 %v801, %v856
  %v920 = vmul.f32 %v706, %v861
  %v921 = vmul.f32 %v804, %v861
  %v922 = vmul.f32 %v708, %v866
  %v923 = vmul.f32 %v806, %v866
  %v924 = vmul.f32 %v711, %v871
  %v925 = vmul.f32 %v809, %v871
  %v926 = vmul.f32 %v713, %v876
  %v927 = vmul.f32 %v811, %v876
  %v928 = vmul.f32 %v716, %v881
  %v929 = vmul.f32 %v814, %v881
  %v930 = vmul.f32 %v718, %v886
  %v931 = vmul.f32 %v816, %v886
  %v932 = vmul.f32 %v721, %v891
  %v933 = vmul.f32 %v819, %v891
  %v934 = vmul.f32 %v723, %v896
  %v935 = vmul.f32 %v821, %v896
  %v936 = vmul.f32 %v726, %v901
  %v937 = vmul.f32 %v824, %v901
  %v938 = vmul.f32 %v728, %v906
  %v939 = vmul.f32 %v826, %v906
  %v940 = vpack.c.bf16 %v910, %v908
  %v941 = vpack.c.bf16 %v911, %v909
  %v942 = vpack.c.bf16 %v914, %v912
  %v943 = vpack.c.bf16 %v915, %v913
  %v944 = vpack.c.bf16 %v918, %v916
  %v945 = vpack.c.bf16 %v919, %v917
  %v946 = vpack.c.bf16 %v922, %v920
  %v947 = vpack.c.bf16 %v923, %v921
  %v948 = vpack.c.bf16 %v926, %v924
  %v949 = vpack.c.bf16 %v927, %v925
  %v950 = vpack.c.bf16 %v930, %v928
  %v951 = vpack.c.bf16 %v931, %v929
  %v952 = vpack.c.bf16 %v934, %v932
  %v953 = vpack.c.bf16 %v935, %v933
  %v954 = vpack.c.bf16 %v938, %v936
  %v955 = vpack.c.bf16 %v939, %v937
  %956 = vmatpush.bf16.msra.mxu0 %v954
  %957 = vmatpush.bf16.msra.mxu0 %v952
  %958 = vmatpush.bf16.msra.mxu0 %v950
  %959 = vmatpush.bf16.msra.mxu0 %v948
  %960 = vmatpush.bf16.msra.mxu0 %v946
  %961 = vmatpush.bf16.msra.mxu0 %v944
  %962 = vmatpush.bf16.msra.mxu0 %v942
  %963 = vmatpush.bf16.msra.mxu0 %v940
  %964 = vmatmul.bf16.gmra.mxu0 %v155
  %v965 = vpop.f32.mrf.mxu0
  %v966 = vadd.f32 0.0, %v965
  %v967 = vpop.f32.mrf.mxu0
  %v968 = vadd.f32 0.0, %v967
  %969 = vmatmul.bf16.gmra.mxu0 %v156
  %v970 = vpop.f32.mrf.mxu0
  %v971 = vadd.f32 0.0, %v970
  %v972 = vpop.f32.mrf.mxu0
  %v973 = vadd.f32 0.0, %v972
  %974 = vmatmul.bf16.gmra.mxu0 %v157
  %v975 = vpop.f32.mrf.mxu0
  %v976 = vadd.f32 0.0, %v975
  %v977 = vpop.f32.mrf.mxu0
  %v978 = vadd.f32 0.0, %v977
  %979 = vmatmul.bf16.gmra.mxu0 %v158
  %v980 = vpop.f32.mrf.mxu0
  %v981 = vadd.f32 0.0, %v980
  %v982 = vpop.f32.mrf.mxu0
  %v983 = vadd.f32 0.0, %v982
  %984 = vmatmul.bf16.gmra.mxu0 %v159
  %v985 = vpop.f32.mrf.mxu0
  %v986 = vadd.f32 0.0, %v985
  %v987 = vpop.f32.mrf.mxu0
  %v988 = vadd.f32 0.0, %v987
  %989 = vmatmul.bf16.gmra.mxu0 %v160
  %v990 = vpop.f32.mrf.mxu0
  %v991 = vadd.f32 0.0, %v990
  %v992 = vpop.f32.mrf.mxu0
  %v993 = vadd.f32 0.0, %v992
  %994 = vmatmul.bf16.gmra.mxu0 %v161
  %v995 = vpop.f32.mrf.mxu0
  %v996 = vadd.f32 0.0, %v995
  %v997 = vpop.f32.mrf.mxu0
  %v998 = vadd.f32 0.0, %v997
  %999 = vmatmul.bf16.gmra.mxu0 %v162
  %v1000 = vpop.f32.mrf.mxu0
  %v1001 = vadd.f32 0.0, %v1000
  %v1002 = vpop.f32.mrf.mxu0
  %v1003 = vadd.f32 0.0, %v1002
  %1004 = vdwg.mxu0
  %1005 = vmatpush.bf16.msra.mxu0 %v955
  %1006 = vmatpush.bf16.msra.mxu0 %v953
  %1007 = vmatpush.bf16.msra.mxu0 %v951
  %1008 = vmatpush.bf16.msra.mxu0 %v949
  %1009 = vmatpush.bf16.msra.mxu0 %v947
  %1010 = vmatpush.bf16.msra.mxu0 %v945
  %1011 = vmatpush.bf16.msra.mxu0 %v943
  %1012 = vmatpush.bf16.msra.mxu0 %v941
  %1013 = vmatmul.bf16.gmra.mxu0 %v155
  %v1014 = vpop.f32.mrf.mxu0
  %v1015 = vadd.f32 0.0, %v1014
  %v1016 = vpop.f32.mrf.mxu0
  %v1017 = vadd.f32 0.0, %v1016
  %1018 = vmatmul.bf16.gmra.mxu0 %v156
  %v1019 = vpop.f32.mrf.mxu0
  %v1020 = vadd.f32 0.0, %v1019
  %v1021 = vpop.f32.mrf.mxu0
  %v1022 = vadd.f32 0.0, %v1021
  %1023 = vmatmul.bf16.gmra.mxu0 %v157
  %v1024 = vpop.f32.mrf.mxu0
  %v1025 = vadd.f32 0.0, %v1024
  %v1026 = vpop.f32.mrf.mxu0
  %v1027 = vadd.f32 0.0, %v1026
  %1028 = vmatmul.bf16.gmra.mxu0 %v158
  %v1029 = vpop.f32.mrf.mxu0
  %v1030 = vadd.f32 0.0, %v1029
  %v1031 = vpop.f32.mrf.mxu0
  %v1032 = vadd.f32 0.0, %v1031
  %1033 = vmatmul.bf16.gmra.mxu0 %v159
  %v1034 = vpop.f32.mrf.mxu0
  %v1035 = vadd.f32 0.0, %v1034
  %v1036 = vpop.f32.mrf.mxu0
  %v1037 = vadd.f32 0.0, %v1036
  %1038 = vmatmul.bf16.gmra.mxu0 %v160
  %v1039 = vpop.f32.mrf.mxu0
  %v1040 = vadd.f32 0.0, %v1039
  %v1041 = vpop.f32.mrf.mxu0
  %v1042 = vadd.f32 0.0, %v1041
  %1043 = vmatmul.bf16.gmra.mxu0 %v161
  %v1044 = vpop.f32.mrf.mxu0
  %v1045 = vadd.f32 0.0, %v1044
  %v1046 = vpop.f32.mrf.mxu0
  %v1047 = vadd.f32 0.0, %v1046
  %1048 = vmatmul.bf16.gmra.mxu0 %v162
  %v1049 = vpop.f32.mrf.mxu0
  %v1050 = vadd.f32 0.0, %v1049
  %v1051 = vpop.f32.mrf.mxu0
  %v1052 = vadd.f32 0.0, %v1051
  %1053 = vdwg.mxu0
  %v1054 = vmul.f32 %v966, %v831
  %v1055 = vmul.f32 %v1015, %v831
  %v1056 = vmul.f32 %v968, %v836
  %v1057 = vmul.f32 %v1017, %v836
  %v1058 = vmul.f32 %v971, %v841
  %v1059 = vmul.f32 %v1020, %v841
  %v1060 = vmul.f32 %v973, %v846
  %v1061 = vmul.f32 %v1022, %v846
  %v1062 = vmul.f32 %v976, %v851
  %v1063 = vmul.f32 %v1025, %v851
  %v1064 = vmul.f32 %v978, %v856
  %v1065 = vmul.f32 %v1027, %v856
  %v1066 = vmul.f32 %v981, %v861
  %v1067 = vmul.f32 %v1030, %v861
  %v1068 = vmul.f32 %v983, %v866
  %v1069 = vmul.f32 %v1032, %v866
  %v1070 = vmul.f32 %v986, %v871
  %v1071 = vmul.f32 %v1035, %v871
  %v1072 = vmul.f32 %v988, %v876
  %v1073 = vmul.f32 %v1037, %v876
  %v1074 = vmul.f32 %v991, %v881
  %v1075 = vmul.f32 %v1040, %v881
  %v1076 = vmul.f32 %v993, %v886
  %v1077 = vmul.f32 %v1042, %v886
  %v1078 = vmul.f32 %v996, %v891
  %v1079 = vmul.f32 %v1045, %v891
  %v1080 = vmul.f32 %v998, %v896
  %v1081 = vmul.f32 %v1047, %v896
  %v1082 = vmul.f32 %v1001, %v901
  %v1083 = vmul.f32 %v1050, %v901
  %v1084 = vmul.f32 %v1003, %v906
  %v1085 = vmul.f32 %v1052, %v906
  %v1086 = vld [vmem:[%s6] sm:$0x3]
  %v1088 = vperm.slane %v1086, 0
  %v1089 = vperm.slane %v1086, 1
  %v1092 = vadd.f32 %v1054, %v1088
  %v1093 = vadd.f32 %v1055, %v1089
  %v1094 = vadd.f32 %v1056, %v1088
  %v1095 = vadd.f32 %v1057, %v1089
  %v1096 = vadd.f32 %v1058, %v1088
  %v1097 = vadd.f32 %v1059, %v1089
  %v1098 = vadd.f32 %v1060, %v1088
  %v1099 = vadd.f32 %v1061, %v1089
  %v1100 = vadd.f32 %v1062, %v1088
  %v1101 = vadd.f32 %v1063, %v1089
  %v1102 = vadd.f32 %v1064, %v1088
  %v1103 = vadd.f32 %v1065, %v1089
  %v1104 = vadd.f32 %v1066, %v1088
  %v1105 = vadd.f32 %v1067, %v1089
  %v1106 = vadd.f32 %v1068, %v1088
  %v1107 = vadd.f32 %v1069, %v1089
  %v1108 = vadd.f32 %v1070, %v1088
  %v1109 = vadd.f32 %v1071, %v1089
  %v1110 = vadd.f32 %v1072, %v1088
  %v1111 = vadd.f32 %v1073, %v1089
  %v1112 = vadd.f32 %v1074, %v1088
  %v1113 = vadd.f32 %v1075, %v1089
  %v1114 = vadd.f32 %v1076, %v1088
  %v1115 = vadd.f32 %v1077, %v1089
  %v1116 = vadd.f32 %v1078, %v1088
  %v1117 = vadd.f32 %v1079, %v1089
  %v1118 = vadd.f32 %v1080, %v1088
  %v1119 = vadd.f32 %v1081, %v1089
  %v1120 = vadd.f32 %v1082, %v1088
  %v1121 = vadd.f32 %v1083, %v1089
  %v1122 = vadd.f32 %v1084, %v1088
  %v1123 = vadd.f32 %v1085, %v1089
  %v1124 = vmax.f32 %v1092, 0.0
  %v1125 = vmax.f32 %v1093, 0.0
  %v1126 = vmax.f32 %v1094, 0.0
  %v1127 = vmax.f32 %v1095, 0.0
  %v1128 = vmax.f32 %v1096, 0.0
  %v1129 = vmax.f32 %v1097, 0.0
  %v1130 = vmax.f32 %v1098, 0.0
  %v1131 = vmax.f32 %v1099, 0.0
  %v1132 = vmax.f32 %v1100, 0.0
  %v1133 = vmax.f32 %v1101, 0.0
  %v1134 = vmax.f32 %v1102, 0.0
  %v1135 = vmax.f32 %v1103, 0.0
  %v1136 = vmax.f32 %v1104, 0.0
  %v1137 = vmax.f32 %v1105, 0.0
  %v1138 = vmax.f32 %v1106, 0.0
  %v1139 = vmax.f32 %v1107, 0.0
  %v1140 = vmax.f32 %v1108, 0.0
  %v1141 = vmax.f32 %v1109, 0.0
  %v1142 = vmax.f32 %v1110, 0.0
  %v1143 = vmax.f32 %v1111, 0.0
  %v1144 = vmax.f32 %v1112, 0.0
  %v1145 = vmax.f32 %v1113, 0.0
  %v1146 = vmax.f32 %v1114, 0.0
  %v1147 = vmax.f32 %v1115, 0.0
  %v1148 = vmax.f32 %v1116, 0.0
  %v1149 = vmax.f32 %v1117, 0.0
  %v1150 = vmax.f32 %v1118, 0.0
  %v1151 = vmax.f32 %v1119, 0.0
  %v1152 = vmax.f32 %v1120, 0.0
  %v1153 = vmax.f32 %v1121, 0.0
  %v1154 = vmax.f32 %v1122, 0.0
  %v1155 = vmax.f32 %v1123, 0.0
  %v1156 = vpack.c.bf16 %v1126, %v1124
  %v1157 = vpack.c.bf16 %v1127, %v1125
  %v1158 = vpack.c.bf16 %v1130, %v1128
  %v1159 = vpack.c.bf16 %v1131, %v1129
  %v1160 = vpack.c.bf16 %v1134, %v1132
  %v1161 = vpack.c.bf16 %v1135, %v1133
  %v1162 = vpack.c.bf16 %v1138, %v1136
  %v1163 = vpack.c.bf16 %v1139, %v1137
  %v1164 = vpack.c.bf16 %v1142, %v1140
  %v1165 = vpack.c.bf16 %v1143, %v1141
  %v1166 = vpack.c.bf16 %v1146, %v1144
  %v1167 = vpack.c.bf16 %v1147, %v1145
  %v1168 = vpack.c.bf16 %v1150, %v1148
  %v1169 = vpack.c.bf16 %v1151, %v1149
  %v1170 = vpack.c.bf16 %v1154, %v1152
  %v1171 = vpack.c.bf16 %v1155, %v1153
  %v1172 = vld [vmem:[%s7] sm:$0xf]
  %v1173 = vld [vmem:[%s7 + $0x4] sm:$0xf]
  %v1174 = vld [vmem:[%s7 + $0x8] sm:$0xf]
  %v1175 = vld [vmem:[%s7 + $0xc] sm:$0xf]
  %v1176 = vld [vmem:[%s7 + $0x10] sm:$0xf]
  %v1177 = vld [vmem:[%s7 + $0x14] sm:$0xf]
  %v1178 = vld [vmem:[%s7 + $0x18] sm:$0xf]
  %v1179 = vld [vmem:[%s7 + $0x1c] sm:$0xf]
  %v1180 = vld [vmem:[%s7 + $0x20] sm:$0xf]
  %v1181 = vld [vmem:[%s7 + $0x24] sm:$0xf]
  %v1182 = vld [vmem:[%s7 + $0x28] sm:$0xf]
  %v1183 = vld [vmem:[%s7 + $0x2c] sm:$0xf]
  %v1184 = vld [vmem:[%s7 + $0x30] sm:$0xf]
  %v1185 = vld [vmem:[%s7 + $0x34] sm:$0xf]
  %v1186 = vld [vmem:[%s7 + $0x38] sm:$0xf]
  %v1187 = vld [vmem:[%s7 + $0x3c] sm:$0xf]
  %v1188 = vld [vmem:[%s7 + $0x40] sm:$0xf]
  %v1189 = vld [vmem:[%s7 + $0x44] sm:$0xf]
  %v1190 = vld [vmem:[%s7 + $0x48] sm:$0xf]
  %v1191 = vld [vmem:[%s7 + $0x4c] sm:$0xf]
  %v1192 = vld [vmem:[%s7 + $0x50] sm:$0xf]
  %v1193 = vld [vmem:[%s7 + $0x54] sm:$0xf]
  %v1194 = vld [vmem:[%s7 + $0x58] sm:$0xf]
  %v1195 = vld [vmem:[%s7 + $0x5c] sm:$0xf]
  %v1196 = vld [vmem:[%s7 + $0x60] sm:$0xf]
  %v1197 = vld [vmem:[%s7 + $0x64] sm:$0xf]
  %v1198 = vld [vmem:[%s7 + $0x68] sm:$0xf]
  %v1199 = vld [vmem:[%s7 + $0x6c] sm:$0xf]
  %v1200 = vld [vmem:[%s7 + $0x70] sm:$0xf]
  %v1201 = vld [vmem:[%s7 + $0x74] sm:$0xf]
  %v1202 = vld [vmem:[%s7 + $0x78] sm:$0xf]
  %v1203 = vld [vmem:[%s7 + $0x7c] sm:$0xf]
  %v1236 = vunpack.c.l.b16 %v1172
  %v1237 = vunpack.c.l.b16 %v1173
  %v1238 = vunpack.c.l.b16 %v1174
  %v1239 = vunpack.c.l.b16 %v1175
  %v1240 = vunpack.c.l.b16 %v1176
  %v1241 = vunpack.c.l.b16 %v1177
  %v1242 = vunpack.c.l.b16 %v1178
  %v1243 = vunpack.c.l.b16 %v1179
  %v1244 = vunpack.c.l.b16 %v1180
  %v1245 = vunpack.c.l.b16 %v1181
  %v1246 = vunpack.c.l.b16 %v1182
  %v1247 = vunpack.c.l.b16 %v1183
  %v1248 = vunpack.c.l.b16 %v1184
  %v1249 = vunpack.c.l.b16 %v1185
  %v1250 = vunpack.c.l.b16 %v1186
  %v1251 = vunpack.c.l.b16 %v1187
  %v1252 = vunpack.c.l.b16 %v1188
  %v1253 = vunpack.c.l.b16 %v1189
  %v1254 = vunpack.c.l.b16 %v1190
  %v1255 = vunpack.c.l.b16 %v1191
  %v1256 = vunpack.c.l.b16 %v1192
  %v1257 = vunpack.c.l.b16 %v1193
  %v1258 = vunpack.c.l.b16 %v1194
  %v1259 = vunpack.c.l.b16 %v1195
  %v1260 = vunpack.c.l.b16 %v1196
  %v1261 = vunpack.c.l.b16 %v1197
  %v1262 = vunpack.c.l.b16 %v1198
  %v1263 = vunpack.c.l.b16 %v1199
  %v1264 = vunpack.c.l.b16 %v1200
  %v1265 = vunpack.c.l.b16 %v1201
  %v1266 = vunpack.c.l.b16 %v1202
  %v1267 = vunpack.c.l.b16 %v1203
  %v1268 = vpack.c.b16 %v1237, %v1236
  %v1269 = vpack.c.b16 %v1239, %v1238
  %v1270 = vpack.c.b16 %v1241, %v1240
  %v1271 = vpack.c.b16 %v1243, %v1242
  %v1272 = vpack.c.b16 %v1245, %v1244
  %v1273 = vpack.c.b16 %v1247, %v1246
  %v1274 = vpack.c.b16 %v1249, %v1248
  %v1275 = vpack.c.b16 %v1251, %v1250
  %v1276 = vpack.c.b16 %v1253, %v1252
  %v1277 = vpack.c.b16 %v1255, %v1254
  %v1278 = vpack.c.b16 %v1257, %v1256
  %v1279 = vpack.c.b16 %v1259, %v1258
  %v1280 = vpack.c.b16 %v1261, %v1260
  %v1281 = vpack.c.b16 %v1263, %v1262
  %v1282 = vpack.c.b16 %v1265, %v1264
  %v1283 = vpack.c.b16 %v1267, %v1266
  %1300 = vmatpush.bf16.msra.mxu0 %v1275
  %1301 = vmatpush.bf16.msra.mxu0 %v1274
  %1302 = vmatpush.bf16.msra.mxu0 %v1273
  %1303 = vmatpush.bf16.msra.mxu0 %v1272
  %1304 = vmatpush.bf16.msra.mxu0 %v1271
  %1305 = vmatpush.bf16.msra.mxu0 %v1270
  %1306 = vmatpush.bf16.msra.mxu0 %v1269
  %1307 = vmatpush.bf16.msra.mxu0 %v1268
  %1308 = vmatmul.bf16.gmra.mxu0 %v1156
  %v1309 = vpop.f32.mrf.mxu0
  %v1310 = vadd.f32 0.0, %v1309
  %v1311 = vpop.f32.mrf.mxu0
  %v1312 = vadd.f32 0.0, %v1311
  %1313 = vmatmul.bf16.gmra.mxu0 %v1158
  %v1314 = vpop.f32.mrf.mxu0
  %v1315 = vadd.f32 0.0, %v1314
  %v1316 = vpop.f32.mrf.mxu0
  %v1317 = vadd.f32 0.0, %v1316
  %1318 = vmatmul.bf16.gmra.mxu0 %v1160
  %v1319 = vpop.f32.mrf.mxu0
  %v1320 = vadd.f32 0.0, %v1319
  %v1321 = vpop.f32.mrf.mxu0
  %v1322 = vadd.f32 0.0, %v1321
  %1323 = vmatmul.bf16.gmra.mxu0 %v1162
  %v1324 = vpop.f32.mrf.mxu0
  %v1325 = vadd.f32 0.0, %v1324
  %v1326 = vpop.f32.mrf.mxu0
  %v1327 = vadd.f32 0.0, %v1326
  %1328 = vmatmul.bf16.gmra.mxu0 %v1164
  %v1329 = vpop.f32.mrf.mxu0
  %v1330 = vadd.f32 0.0, %v1329
  %v1331 = vpop.f32.mrf.mxu0
  %v1332 = vadd.f32 0.0, %v1331
  %1333 = vmatmul.bf16.gmra.mxu0 %v1166
  %v1334 = vpop.f32.mrf.mxu0
  %v1335 = vadd.f32 0.0, %v1334
  %v1336 = vpop.f32.mrf.mxu0
  %v1337 = vadd.f32 0.0, %v1336
  %1338 = vmatmul.bf16.gmra.mxu0 %v1168
  %v1339 = vpop.f32.mrf.mxu0
  %v1340 = vadd.f32 0.0, %v1339
  %v1341 = vpop.f32.mrf.mxu0
  %v1342 = vadd.f32 0.0, %v1341
  %1343 = vmatmul.bf16.gmra.mxu0 %v1170
  %v1344 = vpop.f32.mrf.mxu0
  %v1345 = vadd.f32 0.0, %v1344
  %v1346 = vpop.f32.mrf.mxu0
  %v1347 = vadd.f32 0.0, %v1346
  %1348 = vdwg.mxu0
  %1349 = vmatpush.bf16.msra.mxu0 %v1283
  %1350 = vmatpush.bf16.msra.mxu0 %v1282
  %1351 = vmatpush.bf16.msra.mxu0 %v1281
  %1352 = vmatpush.bf16.msra.mxu0 %v1280
  %1353 = vmatpush.bf16.msra.mxu0 %v1279
  %1354 = vmatpush.bf16.msra.mxu0 %v1278
  %1355 = vmatpush.bf16.msra.mxu0 %v1277
  %1356 = vmatpush.bf16.msra.mxu0 %v1276
  %1357 = vmatmul.bf16.gmra.mxu0 %v1157
  %v1358 = vpop.f32.mrf.mxu0
  %v1359 = vadd.f32 %v1310, %v1358
  %v1360 = vpop.f32.mrf.mxu0
  %v1361 = vadd.f32 %v1312, %v1360
  %1362 = vmatmul.bf16.gmra.mxu0 %v1159
  %v1363 = vpop.f32.mrf.mxu0
  %v1364 = vadd.f32 %v1315, %v1363
  %v1365 = vpop.f32.mrf.mxu0
  %v1366 = vadd.f32 %v1317, %v1365
  %1367 = vmatmul.bf16.gmra.mxu0 %v1161
  %v1368 = vpop.f32.mrf.mxu0
  %v1369 = vadd.f32 %v1320, %v1368
  %v1370 = vpop.f32.mrf.mxu0
  %v1371 = vadd.f32 %v1322, %v1370
  %1372 = vmatmul.bf16.gmra.mxu0 %v1163
  %v1373 = vpop.f32.mrf.mxu0
  %v1374 = vadd.f32 %v1325, %v1373
  %v1375 = vpop.f32.mrf.mxu0
  %v1376 = vadd.f32 %v1327, %v1375
  %1377 = vmatmul.bf16.gmra.mxu0 %v1165
  %v1378 = vpop.f32.mrf.mxu0
  %v1379 = vadd.f32 %v1330, %v1378
  %v1380 = vpop.f32.mrf.mxu0
  %v1381 = vadd.f32 %v1332, %v1380
  %1382 = vmatmul.bf16.gmra.mxu0 %v1167
  %v1383 = vpop.f32.mrf.mxu0
  %v1384 = vadd.f32 %v1335, %v1383
  %v1385 = vpop.f32.mrf.mxu0
  %v1386 = vadd.f32 %v1337, %v1385
  %1387 = vmatmul.bf16.gmra.mxu0 %v1169
  %v1388 = vpop.f32.mrf.mxu0
  %v1389 = vadd.f32 %v1340, %v1388
  %v1390 = vpop.f32.mrf.mxu0
  %v1391 = vadd.f32 %v1342, %v1390
  %1392 = vmatmul.bf16.gmra.mxu0 %v1171
  %v1393 = vpop.f32.mrf.mxu0
  %v1394 = vadd.f32 %v1345, %v1393
  %v1395 = vpop.f32.mrf.mxu0
  %v1396 = vadd.f32 %v1347, %v1395
  %1397 = vdwg.mxu0
  %v1398 = vmul.f32 %v1359, %v831
  %v1399 = vmul.f32 %v1361, %v836
  %v1400 = vmul.f32 %v1364, %v841
  %v1401 = vmul.f32 %v1366, %v846
  %v1402 = vmul.f32 %v1369, %v851
  %v1403 = vmul.f32 %v1371, %v856
  %v1404 = vmul.f32 %v1374, %v861
  %v1405 = vmul.f32 %v1376, %v866
  %v1406 = vmul.f32 %v1379, %v871
  %v1407 = vmul.f32 %v1381, %v876
  %v1408 = vmul.f32 %v1384, %v881
  %v1409 = vmul.f32 %v1386, %v886
  %v1410 = vmul.f32 %v1389, %v891
  %v1411 = vmul.f32 %v1391, %v896
  %v1412 = vmul.f32 %v1394, %v901
  %v1413 = vmul.f32 %v1396, %v906
  %v1414 = vpack.c.bf16 %v1399, %v1398
  %v1415 = vpack.c.bf16 %v1401, %v1400
  %v1416 = vpack.c.bf16 %v1403, %v1402
  %v1417 = vpack.c.bf16 %v1405, %v1404
  %v1418 = vpack.c.bf16 %v1407, %v1406
  %v1419 = vpack.c.bf16 %v1409, %v1408
  %v1420 = vpack.c.bf16 %v1411, %v1410
  %v1421 = vpack.c.bf16 %v1413, %v1412
  %1422 = vmatpush.bf16.msra.mxu0 %v1421
  %1423 = vmatpush.bf16.msra.mxu0 %v1420
  %1424 = vmatpush.bf16.msra.mxu0 %v1419
  %1425 = vmatpush.bf16.msra.mxu0 %v1418
  %1426 = vmatpush.bf16.msra.mxu0 %v1417
  %1427 = vmatpush.bf16.msra.mxu0 %v1416
  %1428 = vmatpush.bf16.msra.mxu0 %v1415
  %1429 = vmatpush.bf16.msra.mxu0 %v1414
  %1430 = vmatmul.bf16.gmra.mxu0 %v155
  %v1431 = vpop.f32.mrf.mxu0
  %v1432 = vadd.f32 0.0, %v1431
  %v1433 = vpop.f32.mrf.mxu0
  %v1434 = vadd.f32 0.0, %v1433
  %1435 = vmatmul.bf16.gmra.mxu0 %v156
  %v1436 = vpop.f32.mrf.mxu0
  %v1437 = vadd.f32 0.0, %v1436
  %v1438 = vpop.f32.mrf.mxu0
  %v1439 = vadd.f32 0.0, %v1438
  %1440 = vmatmul.bf16.gmra.mxu0 %v157
  %v1441 = vpop.f32.mrf.mxu0
  %v1442 = vadd.f32 0.0, %v1441
  %v1443 = vpop.f32.mrf.mxu0
  %v1444 = vadd.f32 0.0, %v1443
  %1445 = vmatmul.bf16.gmra.mxu0 %v158
  %v1446 = vpop.f32.mrf.mxu0
  %v1447 = vadd.f32 0.0, %v1446
  %v1448 = vpop.f32.mrf.mxu0
  %v1449 = vadd.f32 0.0, %v1448
  %1450 = vmatmul.bf16.gmra.mxu0 %v159
  %v1451 = vpop.f32.mrf.mxu0
  %v1452 = vadd.f32 0.0, %v1451
  %v1453 = vpop.f32.mrf.mxu0
  %v1454 = vadd.f32 0.0, %v1453
  %1455 = vmatmul.bf16.gmra.mxu0 %v160
  %v1456 = vpop.f32.mrf.mxu0
  %v1457 = vadd.f32 0.0, %v1456
  %v1458 = vpop.f32.mrf.mxu0
  %v1459 = vadd.f32 0.0, %v1458
  %1460 = vmatmul.bf16.gmra.mxu0 %v161
  %v1461 = vpop.f32.mrf.mxu0
  %v1462 = vadd.f32 0.0, %v1461
  %v1463 = vpop.f32.mrf.mxu0
  %v1464 = vadd.f32 0.0, %v1463
  %1465 = vmatmul.bf16.gmra.mxu0 %v162
  %v1466 = vpop.f32.mrf.mxu0
  %v1467 = vadd.f32 0.0, %v1466
  %v1468 = vpop.f32.mrf.mxu0
  %v1469 = vadd.f32 0.0, %v1468
  %1470 = vdwg.mxu0
  %v1471 = vmul.f32 %v1432, %v831
  %v1472 = vmul.f32 %v1434, %v836
  %v1473 = vmul.f32 %v1437, %v841
  %v1474 = vmul.f32 %v1439, %v846
  %v1475 = vmul.f32 %v1442, %v851
  %v1476 = vmul.f32 %v1444, %v856
  %v1477 = vmul.f32 %v1447, %v861
  %v1478 = vmul.f32 %v1449, %v866
  %v1479 = vmul.f32 %v1452, %v871
  %v1480 = vmul.f32 %v1454, %v876
  %v1481 = vmul.f32 %v1457, %v881
  %v1482 = vmul.f32 %v1459, %v886
  %v1483 = vmul.f32 %v1462, %v891
  %v1484 = vmul.f32 %v1464, %v896
  %v1485 = vmul.f32 %v1467, %v901
  %v1486 = vmul.f32 %v1469, %v906
  %v1487 = vld [vmem:[%s8] sm:$0x1]
  %v1489 = vperm.slane %v1487, 0
  %v1491 = vadd.f32 %v1471, %v1489
  %v1492 = vadd.f32 %v1472, %v1489
  %v1493 = vadd.f32 %v1473, %v1489
  %v1494 = vadd.f32 %v1474, %v1489
  %v1495 = vadd.f32 %v1475, %v1489
  %v1496 = vadd.f32 %v1476, %v1489
  %v1497 = vadd.f32 %v1477, %v1489
  %v1498 = vadd.f32 %v1478, %v1489
  %v1499 = vadd.f32 %v1479, %v1489
  %v1500 = vadd.f32 %v1480, %v1489
  %v1501 = vadd.f32 %v1481, %v1489
  %v1502 = vadd.f32 %v1482, %v1489
  %v1503 = vadd.f32 %v1483, %v1489
  %v1504 = vadd.f32 %v1484, %v1489
  %v1505 = vadd.f32 %v1485, %v1489
  %v1506 = vadd.f32 %v1486, %v1489
  %v1507 = vmax.f32 %v1491, 0.0
  %v1508 = vmax.f32 %v1492, 0.0
  %v1509 = vmax.f32 %v1493, 0.0
  %v1510 = vmax.f32 %v1494, 0.0
  %v1511 = vmax.f32 %v1495, 0.0
  %v1512 = vmax.f32 %v1496, 0.0
  %v1513 = vmax.f32 %v1497, 0.0
  %v1514 = vmax.f32 %v1498, 0.0
  %v1515 = vmax.f32 %v1499, 0.0
  %v1516 = vmax.f32 %v1500, 0.0
  %v1517 = vmax.f32 %v1501, 0.0
  %v1518 = vmax.f32 %v1502, 0.0
  %v1519 = vmax.f32 %v1503, 0.0
  %v1520 = vmax.f32 %v1504, 0.0
  %v1521 = vmax.f32 %v1505, 0.0
  %v1522 = vmax.f32 %v1506, 0.0
  %v1523 = vpack.c.bf16 %v1508, %v1507
  %v1524 = vpack.c.bf16 %v1510, %v1509
  %v1525 = vpack.c.bf16 %v1512, %v1511
  %v1526 = vpack.c.bf16 %v1514, %v1513
  %v1527 = vpack.c.bf16 %v1516, %v1515
  %v1528 = vpack.c.bf16 %v1518, %v1517
  %v1529 = vpack.c.bf16 %v1520, %v1519
  %v1530 = vpack.c.bf16 %v1522, %v1521
  %v1531 = vld [vmem:[%s9] sm:$0xf]
  %v1532 = vld [vmem:[%s9 + $0x4] sm:$0xf]
  %v1533 = vld [vmem:[%s9 + $0x8] sm:$0xf]
  %v1534 = vld [vmem:[%s9 + $0xc] sm:$0xf]
  %v1535 = vld [vmem:[%s9 + $0x10] sm:$0xf]
  %v1536 = vld [vmem:[%s9 + $0x14] sm:$0xf]
  %v1537 = vld [vmem:[%s9 + $0x18] sm:$0xf]
  %v1538 = vld [vmem:[%s9 + $0x1c] sm:$0xf]
  %v1539 = vld [vmem:[%s9 + $0x20] sm:$0xf]
  %v1540 = vld [vmem:[%s9 + $0x24] sm:$0xf]
  %v1541 = vld [vmem:[%s9 + $0x28] sm:$0xf]
  %v1542 = vld [vmem:[%s9 + $0x2c] sm:$0xf]
  %v1543 = vld [vmem:[%s9 + $0x30] sm:$0xf]
  %v1544 = vld [vmem:[%s9 + $0x34] sm:$0xf]
  %v1545 = vld [vmem:[%s9 + $0x38] sm:$0xf]
  %v1546 = vld [vmem:[%s9 + $0x3c] sm:$0xf]
  %v1563 = vunpack.c.l.b16 %v1531
  %v1564 = vunpack.c.l.b16 %v1532
  %v1565 = vunpack.c.l.b16 %v1533
  %v1566 = vunpack.c.l.b16 %v1534
  %v1567 = vunpack.c.l.b16 %v1535
  %v1568 = vunpack.c.l.b16 %v1536
  %v1569 = vunpack.c.l.b16 %v1537
  %v1570 = vunpack.c.l.b16 %v1538
  %v1571 = vunpack.c.l.b16 %v1539
  %v1572 = vunpack.c.l.b16 %v1540
  %v1573 = vunpack.c.l.b16 %v1541
  %v1574 = vunpack.c.l.b16 %v1542
  %v1575 = vunpack.c.l.b16 %v1543
  %v1576 = vunpack.c.l.b16 %v1544
  %v1577 = vunpack.c.l.b16 %v1545
  %v1578 = vunpack.c.l.b16 %v1546
  %v1579 = vpack.c.b16 %v1564, %v1563
  %v1580 = vpack.c.b16 %v1566, %v1565
  %v1581 = vpack.c.b16 %v1568, %v1567
  %v1582 = vpack.c.b16 %v1570, %v1569
  %v1583 = vpack.c.b16 %v1572, %v1571
  %v1584 = vpack.c.b16 %v1574, %v1573
  %v1585 = vpack.c.b16 %v1576, %v1575
  %v1586 = vpack.c.b16 %v1578, %v1577
  %1595 = vmatpush.bf16.msra.mxu0 %v1586
  %1596 = vmatpush.bf16.msra.mxu0 %v1585
  %1597 = vmatpush.bf16.msra.mxu0 %v1584
  %1598 = vmatpush.bf16.msra.mxu0 %v1583
  %1599 = vmatpush.bf16.msra.mxu0 %v1582
  %1600 = vmatpush.bf16.msra.mxu0 %v1581
  %1601 = vmatpush.bf16.msra.mxu0 %v1580
  %1602 = vmatpush.bf16.msra.mxu0 %v1579
  %1603 = vmatmul.bf16.gmra.mxu0 %v1523
  %v1604 = vpop.f32.mrf.mxu0
  %v1605 = vadd.f32 0.0, %v1604
  %v1606 = vpop.f32.mrf.mxu0
  %v1607 = vadd.f32 0.0, %v1606
  %1608 = vmatmul.bf16.gmra.mxu0 %v1524
  %v1609 = vpop.f32.mrf.mxu0
  %v1610 = vadd.f32 0.0, %v1609
  %v1611 = vpop.f32.mrf.mxu0
  %v1612 = vadd.f32 0.0, %v1611
  %1613 = vmatmul.bf16.gmra.mxu0 %v1525
  %v1614 = vpop.f32.mrf.mxu0
  %v1615 = vadd.f32 0.0, %v1614
  %v1616 = vpop.f32.mrf.mxu0
  %v1617 = vadd.f32 0.0, %v1616
  %1618 = vmatmul.bf16.gmra.mxu0 %v1526
  %v1619 = vpop.f32.mrf.mxu0
  %v1620 = vadd.f32 0.0, %v1619
  %v1621 = vpop.f32.mrf.mxu0
  %v1622 = vadd.f32 0.0, %v1621
  %1623 = vmatmul.bf16.gmra.mxu0 %v1527
  %v1624 = vpop.f32.mrf.mxu0
  %v1625 = vadd.f32 0.0, %v1624
  %v1626 = vpop.f32.mrf.mxu0
  %v1627 = vadd.f32 0.0, %v1626
  %1628 = vmatmul.bf16.gmra.mxu0 %v1528
  %v1629 = vpop.f32.mrf.mxu0
  %v1630 = vadd.f32 0.0, %v1629
  %v1631 = vpop.f32.mrf.mxu0
  %v1632 = vadd.f32 0.0, %v1631
  %1633 = vmatmul.bf16.gmra.mxu0 %v1529
  %v1634 = vpop.f32.mrf.mxu0
  %v1635 = vadd.f32 0.0, %v1634
  %v1636 = vpop.f32.mrf.mxu0
  %v1637 = vadd.f32 0.0, %v1636
  %1638 = vmatmul.bf16.gmra.mxu0 %v1530
  %v1639 = vpop.f32.mrf.mxu0
  %v1640 = vadd.f32 0.0, %v1639
  %v1641 = vpop.f32.mrf.mxu0
  %v1642 = vadd.f32 0.0, %v1641
  %1643 = vdwg.mxu0
  %v1644 = vmul.f32 %v1605, %v831
  %v1645 = vmul.f32 %v1607, %v836
  %v1646 = vmul.f32 %v1610, %v841
  %v1647 = vmul.f32 %v1612, %v846
  %v1648 = vmul.f32 %v1615, %v851
  %v1649 = vmul.f32 %v1617, %v856
  %v1650 = vmul.f32 %v1620, %v861
  %v1651 = vmul.f32 %v1622, %v866
  %v1652 = vmul.f32 %v1625, %v871
  %v1653 = vmul.f32 %v1627, %v876
  %v1654 = vmul.f32 %v1630, %v881
  %v1655 = vmul.f32 %v1632, %v886
  %v1656 = vmul.f32 %v1635, %v891
  %v1657 = vmul.f32 %v1637, %v896
  %v1658 = vmul.f32 %v1640, %v901
  %v1659 = vmul.f32 %v1642, %v906
  %v1660 = vpack.c.bf16 %v1645, %v1644
  %v1661 = vpack.c.bf16 %v1647, %v1646
  %v1662 = vpack.c.bf16 %v1649, %v1648
  %v1663 = vpack.c.bf16 %v1651, %v1650
  %v1664 = vpack.c.bf16 %v1653, %v1652
  %v1665 = vpack.c.bf16 %v1655, %v1654
  %v1666 = vpack.c.bf16 %v1657, %v1656
  %v1667 = vpack.c.bf16 %v1659, %v1658
  %1668 = vmatpush.bf16.msra.mxu0 %v1667
  %1669 = vmatpush.bf16.msra.mxu0 %v1666
  %1670 = vmatpush.bf16.msra.mxu0 %v1665
  %1671 = vmatpush.bf16.msra.mxu0 %v1664
  %1672 = vmatpush.bf16.msra.mxu0 %v1663
  %1673 = vmatpush.bf16.msra.mxu0 %v1662
  %1674 = vmatpush.bf16.msra.mxu0 %v1661
  %1675 = vmatpush.bf16.msra.mxu0 %v1660
  %1676 = vmatmul.bf16.gmra.mxu0 %v155
  %v1677 = vpop.f32.mrf.mxu0
  %v1678 = vadd.f32 0.0, %v1677
  %v1679 = vpop.f32.mrf.mxu0
  %v1680 = vadd.f32 0.0, %v1679
  %1681 = vmatmul.bf16.gmra.mxu0 %v156
  %v1682 = vpop.f32.mrf.mxu0
  %v1683 = vadd.f32 0.0, %v1682
  %v1684 = vpop.f32.mrf.mxu0
  %v1685 = vadd.f32 0.0, %v1684
  %1686 = vmatmul.bf16.gmra.mxu0 %v157
  %v1687 = vpop.f32.mrf.mxu0
  %v1688 = vadd.f32 0.0, %v1687
  %v1689 = vpop.f32.mrf.mxu0
  %v1690 = vadd.f32 0.0, %v1689
  %1691 = vmatmul.bf16.gmra.mxu0 %v158
  %v1692 = vpop.f32.mrf.mxu0
  %v1693 = vadd.f32 0.0, %v1692
  %v1694 = vpop.f32.mrf.mxu0
  %v1695 = vadd.f32 0.0, %v1694
  %1696 = vmatmul.bf16.gmra.mxu0 %v159
  %v1697 = vpop.f32.mrf.mxu0
  %v1698 = vadd.f32 0.0, %v1697
  %v1699 = vpop.f32.mrf.mxu0
  %v1700 = vadd.f32 0.0, %v1699
  %1701 = vmatmul.bf16.gmra.mxu0 %v160
  %v1702 = vpop.f32.mrf.mxu0
  %v1703 = vadd.f32 0.0, %v1702
  %v1704 = vpop.f32.mrf.mxu0
  %v1705 = vadd.f32 0.0, %v1704
  %1706 = vmatmul.bf16.gmra.mxu0 %v161
  %v1707 = vpop.f32.mrf.mxu0
  %v1708 = vadd.f32 0.0, %v1707
  %v1709 = vpop.f32.mrf.mxu0
  %v1710 = vadd.f32 0.0, %v1709
  %1711 = vmatmul.bf16.gmra.mxu0 %v162
  %v1712 = vpop.f32.mrf.mxu0
  %v1713 = vadd.f32 0.0, %v1712
  %v1714 = vpop.f32.mrf.mxu0
  %v1715 = vadd.f32 0.0, %v1714
  %1716 = vdwg.mxu0
  %v1717 = vmul.f32 %v1678, %v831
  %v1718 = vmul.f32 %v1680, %v836
  %v1719 = vmul.f32 %v1683, %v841
  %v1720 = vmul.f32 %v1685, %v846
  %v1721 = vmul.f32 %v1688, %v851
  %v1722 = vmul.f32 %v1690, %v856
  %v1723 = vmul.f32 %v1693, %v861
  %v1724 = vmul.f32 %v1695, %v866
  %v1725 = vmul.f32 %v1698, %v871
  %v1726 = vmul.f32 %v1700, %v876
  %v1727 = vmul.f32 %v1703, %v881
  %v1728 = vmul.f32 %v1705, %v886
  %v1729 = vmul.f32 %v1708, %v891
  %v1730 = vmul.f32 %v1710, %v896
  %v1731 = vmul.f32 %v1713, %v901
  %v1732 = vmul.f32 %v1715, %v906
  %v1733 = vld [vmem:[%s10] sm:$0x1]
  %v1735 = vperm.slane %v1733, 0
  %v1737 = vadd.f32 %v1717, %v1735
  %v1738 = vadd.f32 %v1718, %v1735
  %v1739 = vadd.f32 %v1719, %v1735
  %v1740 = vadd.f32 %v1720, %v1735
  %v1741 = vadd.f32 %v1721, %v1735
  %v1742 = vadd.f32 %v1722, %v1735
  %v1743 = vadd.f32 %v1723, %v1735
  %v1744 = vadd.f32 %v1724, %v1735
  %v1745 = vadd.f32 %v1725, %v1735
  %v1746 = vadd.f32 %v1726, %v1735
  %v1747 = vadd.f32 %v1727, %v1735
  %v1748 = vadd.f32 %v1728, %v1735
  %v1749 = vadd.f32 %v1729, %v1735
  %v1750 = vadd.f32 %v1730, %v1735
  %v1751 = vadd.f32 %v1731, %v1735
  %v1752 = vadd.f32 %v1732, %v1735
  %v1753 = vmax.f32 %v1737, 0.0
  %v1754 = vmax.f32 %v1738, 0.0
  %v1755 = vmax.f32 %v1739, 0.0
  %v1756 = vmax.f32 %v1740, 0.0
  %v1757 = vmax.f32 %v1741, 0.0
  %v1758 = vmax.f32 %v1742, 0.0
  %v1759 = vmax.f32 %v1743, 0.0
  %v1760 = vmax.f32 %v1744, 0.0
  %v1761 = vmax.f32 %v1745, 0.0
  %v1762 = vmax.f32 %v1746, 0.0
  %v1763 = vmax.f32 %v1747, 0.0
  %v1764 = vmax.f32 %v1748, 0.0
  %v1765 = vmax.f32 %v1749, 0.0
  %v1766 = vmax.f32 %v1750, 0.0
  %v1767 = vmax.f32 %v1751, 0.0
  %v1768 = vmax.f32 %v1752, 0.0
  %v1769 = vpack.c.bf16 %v1754, %v1753
  %v1770 = vpack.c.bf16 %v1756, %v1755
  %v1771 = vpack.c.bf16 %v1758, %v1757
  %v1772 = vpack.c.bf16 %v1760, %v1759
  %v1773 = vpack.c.bf16 %v1762, %v1761
  %v1774 = vpack.c.bf16 %v1764, %v1763
  %v1775 = vpack.c.bf16 %v1766, %v1765
  %v1776 = vpack.c.bf16 %v1768, %v1767
  %v1777 = vld [vmem:[%s11] sm:$0xf]
  %v1778 = vld [vmem:[%s11 + $0x4] sm:$0xf]
  %v1779 = vld [vmem:[%s11 + $0x8] sm:$0xf]
  %v1780 = vld [vmem:[%s11 + $0xc] sm:$0xf]
  %v1781 = vld [vmem:[%s11 + $0x10] sm:$0xf]
  %v1782 = vld [vmem:[%s11 + $0x14] sm:$0xf]
  %v1783 = vld [vmem:[%s11 + $0x18] sm:$0xf]
  %v1784 = vld [vmem:[%s11 + $0x1c] sm:$0xf]
  %v1793 = vunpack.c.l.b16 %v1777
  %v1794 = vunpack.c.l.b16 %v1778
  %v1795 = vunpack.c.l.b16 %v1779
  %v1796 = vunpack.c.l.b16 %v1780
  %v1797 = vunpack.c.l.b16 %v1781
  %v1798 = vunpack.c.l.b16 %v1782
  %v1799 = vunpack.c.l.b16 %v1783
  %v1800 = vunpack.c.l.b16 %v1784
  %v1801 = vpack.c.b16 %v1794, %v1793
  %v1802 = vpack.c.b16 %v1796, %v1795
  %v1803 = vpack.c.b16 %v1798, %v1797
  %v1804 = vpack.c.b16 %v1800, %v1799
  %vm1809 = vcmask 523264
  %v1811 = vsel %vm1809, %v1769, 0
  %v1814 = vsel %vm1809, %v1770, 0
  %v1817 = vsel %vm1809, %v1771, 0
  %v1820 = vsel %vm1809, %v1772, 0
  %v1823 = vsel %vm1809, %v1773, 0
  %v1826 = vsel %vm1809, %v1774, 0
  %v1829 = vsel %vm1809, %v1775, 0
  %v1832 = vsel %vm1809, %v1776, 0
  %1834 = vmatpush.bf16.msra.mxu0 0
  %1835 = vmatpush.bf16.msra.mxu0 0
  %1836 = vmatpush.bf16.msra.mxu0 0
  %1837 = vmatpush.bf16.msra.mxu0 0
  %1838 = vmatpush.bf16.msra.mxu0 %v1804
  %1839 = vmatpush.bf16.msra.mxu0 %v1803
  %1840 = vmatpush.bf16.msra.mxu0 %v1802
  %1841 = vmatpush.bf16.msra.mxu0 %v1801
  %1842 = vmatmul.bf16.gmra.mxu0 %v1811
  %v1843 = vpop.f32.mrf.mxu0
  %v1844 = vadd.f32 0.0, %v1843
  %v1845 = vpop.f32.mrf.mxu0
  %v1846 = vadd.f32 0.0, %v1845
  %1847 = vmatmul.bf16.gmra.mxu0 %v1814
  %v1848 = vpop.f32.mrf.mxu0
  %v1849 = vadd.f32 0.0, %v1848
  %v1850 = vpop.f32.mrf.mxu0
  %v1851 = vadd.f32 0.0, %v1850
  %1852 = vmatmul.bf16.gmra.mxu0 %v1817
  %v1853 = vpop.f32.mrf.mxu0
  %v1854 = vadd.f32 0.0, %v1853
  %v1855 = vpop.f32.mrf.mxu0
  %v1856 = vadd.f32 0.0, %v1855
  %1857 = vmatmul.bf16.gmra.mxu0 %v1820
  %v1858 = vpop.f32.mrf.mxu0
  %v1859 = vadd.f32 0.0, %v1858
  %v1860 = vpop.f32.mrf.mxu0
  %v1861 = vadd.f32 0.0, %v1860
  %1862 = vmatmul.bf16.gmra.mxu0 %v1823
  %v1863 = vpop.f32.mrf.mxu0
  %v1864 = vadd.f32 0.0, %v1863
  %v1865 = vpop.f32.mrf.mxu0
  %v1866 = vadd.f32 0.0, %v1865
  %1867 = vmatmul.bf16.gmra.mxu0 %v1826
  %v1868 = vpop.f32.mrf.mxu0
  %v1869 = vadd.f32 0.0, %v1868
  %v1870 = vpop.f32.mrf.mxu0
  %v1871 = vadd.f32 0.0, %v1870
  %1872 = vmatmul.bf16.gmra.mxu0 %v1829
  %v1873 = vpop.f32.mrf.mxu0
  %v1874 = vadd.f32 0.0, %v1873
  %v1875 = vpop.f32.mrf.mxu0
  %v1876 = vadd.f32 0.0, %v1875
  %1877 = vmatmul.bf16.gmra.mxu0 %v1832
  %v1878 = vpop.f32.mrf.mxu0
  %v1879 = vadd.f32 0.0, %v1878
  %v1880 = vpop.f32.mrf.mxu0
  %v1881 = vadd.f32 0.0, %v1880
  %1882 = vdwg.mxu0
  %v1883 = vmul.f32 %v1844, %v831
  %v1884 = vmul.f32 %v1846, %v836
  %v1885 = vmul.f32 %v1849, %v841
  %v1886 = vmul.f32 %v1851, %v846
  %v1887 = vmul.f32 %v1854, %v851
  %v1888 = vmul.f32 %v1856, %v856
  %v1889 = vmul.f32 %v1859, %v861
  %v1890 = vmul.f32 %v1861, %v866
  %v1891 = vmul.f32 %v1864, %v871
  %v1892 = vmul.f32 %v1866, %v876
  %v1893 = vmul.f32 %v1869, %v881
  %v1894 = vmul.f32 %v1871, %v886
  %v1895 = vmul.f32 %v1874, %v891
  %v1896 = vmul.f32 %v1876, %v896
  %v1897 = vmul.f32 %v1879, %v901
  %v1898 = vmul.f32 %v1881, %v906
  %v1899 = vpack.c.bf16 %v1884, %v1883
  %v1900 = vpack.c.bf16 %v1886, %v1885
  %v1901 = vpack.c.bf16 %v1888, %v1887
  %v1902 = vpack.c.bf16 %v1890, %v1889
  %v1903 = vpack.c.bf16 %v1892, %v1891
  %v1904 = vpack.c.bf16 %v1894, %v1893
  %v1905 = vpack.c.bf16 %v1896, %v1895
  %v1906 = vpack.c.bf16 %v1898, %v1897
  %1907 = vmatpush.bf16.msra.mxu0 %v1906
  %1908 = vmatpush.bf16.msra.mxu0 %v1905
  %1909 = vmatpush.bf16.msra.mxu0 %v1904
  %1910 = vmatpush.bf16.msra.mxu0 %v1903
  %1911 = vmatpush.bf16.msra.mxu0 %v1902
  %1912 = vmatpush.bf16.msra.mxu0 %v1901
  %1913 = vmatpush.bf16.msra.mxu0 %v1900
  %1914 = vmatpush.bf16.msra.mxu0 %v1899
  %1915 = vmatmul.bf16.gmra.mxu0 %v155
  %v1916 = vpop.f32.mrf.mxu0
  %v1917 = vadd.f32 0.0, %v1916
  %v1918 = vpop.f32.mrf.mxu0
  %v1919 = vadd.f32 0.0, %v1918
  %1920 = vmatmul.bf16.gmra.mxu0 %v156
  %v1921 = vpop.f32.mrf.mxu0
  %v1922 = vadd.f32 0.0, %v1921
  %v1923 = vpop.f32.mrf.mxu0
  %v1924 = vadd.f32 0.0, %v1923
  %1925 = vmatmul.bf16.gmra.mxu0 %v157
  %v1926 = vpop.f32.mrf.mxu0
  %v1927 = vadd.f32 0.0, %v1926
  %v1928 = vpop.f32.mrf.mxu0
  %v1929 = vadd.f32 0.0, %v1928
  %1930 = vmatmul.bf16.gmra.mxu0 %v158
  %v1931 = vpop.f32.mrf.mxu0
  %v1932 = vadd.f32 0.0, %v1931
  %v1933 = vpop.f32.mrf.mxu0
  %v1934 = vadd.f32 0.0, %v1933
  %1935 = vmatmul.bf16.gmra.mxu0 %v159
  %v1936 = vpop.f32.mrf.mxu0
  %v1937 = vadd.f32 0.0, %v1936
  %v1938 = vpop.f32.mrf.mxu0
  %v1939 = vadd.f32 0.0, %v1938
  %1940 = vmatmul.bf16.gmra.mxu0 %v160
  %v1941 = vpop.f32.mrf.mxu0
  %v1942 = vadd.f32 0.0, %v1941
  %v1943 = vpop.f32.mrf.mxu0
  %v1944 = vadd.f32 0.0, %v1943
  %1945 = vmatmul.bf16.gmra.mxu0 %v161
  %v1946 = vpop.f32.mrf.mxu0
  %v1947 = vadd.f32 0.0, %v1946
  %v1948 = vpop.f32.mrf.mxu0
  %v1949 = vadd.f32 0.0, %v1948
  %1950 = vmatmul.bf16.gmra.mxu0 %v162
  %v1951 = vpop.f32.mrf.mxu0
  %v1952 = vadd.f32 0.0, %v1951
  %v1953 = vpop.f32.mrf.mxu0
  %v1954 = vadd.f32 0.0, %v1953
  %1955 = vdwg.mxu0
  %v1956 = vmul.f32 %v1917, %v831
  %v1957 = vmul.f32 %v1919, %v836
  %v1958 = vmul.f32 %v1922, %v841
  %v1959 = vmul.f32 %v1924, %v846
  %v1960 = vmul.f32 %v1927, %v851
  %v1961 = vmul.f32 %v1929, %v856
  %v1962 = vmul.f32 %v1932, %v861
  %v1963 = vmul.f32 %v1934, %v866
  %v1964 = vmul.f32 %v1937, %v871
  %v1965 = vmul.f32 %v1939, %v876
  %v1966 = vmul.f32 %v1942, %v881
  %v1967 = vmul.f32 %v1944, %v886
  %v1968 = vmul.f32 %v1947, %v891
  %v1969 = vmul.f32 %v1949, %v896
  %v1970 = vmul.f32 %v1952, %v901
  %v1971 = vmul.f32 %v1954, %v906
  %v1972 = vld [vmem:[%s12] sm:$0x1]
  %v1974 = vperm.slane %v1972, 0
  %v1976 = vadd.f32 %v1956, %v1974
  %v1977 = vadd.f32 %v1957, %v1974
  %v1978 = vadd.f32 %v1958, %v1974
  %v1979 = vadd.f32 %v1959, %v1974
  %v1980 = vadd.f32 %v1960, %v1974
  %v1981 = vadd.f32 %v1961, %v1974
  %v1982 = vadd.f32 %v1962, %v1974
  %v1983 = vadd.f32 %v1963, %v1974
  %v1984 = vadd.f32 %v1964, %v1974
  %v1985 = vadd.f32 %v1965, %v1974
  %v1986 = vadd.f32 %v1966, %v1974
  %v1987 = vadd.f32 %v1967, %v1974
  %v1988 = vadd.f32 %v1968, %v1974
  %v1989 = vadd.f32 %v1969, %v1974
  %v1990 = vadd.f32 %v1970, %v1974
  %v1991 = vadd.f32 %v1971, %v1974
  %v1992 = vmax.f32 %v1976, 0.0
  %v1993 = vmax.f32 %v1977, 0.0
  %v1994 = vmax.f32 %v1978, 0.0
  %v1995 = vmax.f32 %v1979, 0.0
  %v1996 = vmax.f32 %v1980, 0.0
  %v1997 = vmax.f32 %v1981, 0.0
  %v1998 = vmax.f32 %v1982, 0.0
  %v1999 = vmax.f32 %v1983, 0.0
  %v2000 = vmax.f32 %v1984, 0.0
  %v2001 = vmax.f32 %v1985, 0.0
  %v2002 = vmax.f32 %v1986, 0.0
  %v2003 = vmax.f32 %v1987, 0.0
  %v2004 = vmax.f32 %v1988, 0.0
  %v2005 = vmax.f32 %v1989, 0.0
  %v2006 = vmax.f32 %v1990, 0.0
  %v2007 = vmax.f32 %v1991, 0.0
  %v2008 = vpack.c.bf16 %v1993, %v1992
  %v2009 = vpack.c.bf16 %v1995, %v1994
  %v2010 = vpack.c.bf16 %v1997, %v1996
  %v2011 = vpack.c.bf16 %v1999, %v1998
  %v2012 = vpack.c.bf16 %v2001, %v2000
  %v2013 = vpack.c.bf16 %v2003, %v2002
  %v2014 = vpack.c.bf16 %v2005, %v2004
  %v2015 = vpack.c.bf16 %v2007, %v2006
  %v2016 = vld [vmem:[%s13] sm:$0xf]
  %v2017 = vld [vmem:[%s13 + $0x4] sm:$0xf]
  %v2018 = vld [vmem:[%s13 + $0x8] sm:$0xf]
  %v2019 = vld [vmem:[%s13 + $0xc] sm:$0xf]
  %v2024 = vunpack.c.l.b16 %v2016
  %v2025 = vunpack.c.l.b16 %v2017
  %v2026 = vunpack.c.l.b16 %v2018
  %v2027 = vunpack.c.l.b16 %v2019
  %v2028 = vpack.c.b16 %v2025, %v2024
  %v2029 = vpack.c.b16 %v2027, %v2026
  %vm2032 = vcmask 261120
  %v2034 = vsel %vm2032, %v2008, 0
  %v2037 = vsel %vm2032, %v2009, 0
  %v2040 = vsel %vm2032, %v2010, 0
  %v2043 = vsel %vm2032, %v2011, 0
  %v2046 = vsel %vm2032, %v2012, 0
  %v2049 = vsel %vm2032, %v2013, 0
  %v2052 = vsel %vm2032, %v2014, 0
  %v2055 = vsel %vm2032, %v2015, 0
  %2057 = vmatpush.bf16.msra.mxu0 0
  %2058 = vmatpush.bf16.msra.mxu0 0
  %2059 = vmatpush.bf16.msra.mxu0 0
  %2060 = vmatpush.bf16.msra.mxu0 0
  %2061 = vmatpush.bf16.msra.mxu0 0
  %2062 = vmatpush.bf16.msra.mxu0 0
  %2063 = vmatpush.bf16.msra.mxu0 %v2029
  %2064 = vmatpush.bf16.msra.mxu0 %v2028
  %2065 = vmatmul.bf16.gmra.mxu0 %v2034
  %v2066 = vpop.f32.mrf.mxu0
  %v2067 = vadd.f32 0.0, %v2066
  %v2068 = vpop.f32.mrf.mxu0
  %v2069 = vadd.f32 0.0, %v2068
  %2070 = vmatmul.bf16.gmra.mxu0 %v2037
  %v2071 = vpop.f32.mrf.mxu0
  %v2072 = vadd.f32 0.0, %v2071
  %v2073 = vpop.f32.mrf.mxu0
  %v2074 = vadd.f32 0.0, %v2073
  %2075 = vmatmul.bf16.gmra.mxu0 %v2040
  %v2076 = vpop.f32.mrf.mxu0
  %v2077 = vadd.f32 0.0, %v2076
  %v2078 = vpop.f32.mrf.mxu0
  %v2079 = vadd.f32 0.0, %v2078
  %2080 = vmatmul.bf16.gmra.mxu0 %v2043
  %v2081 = vpop.f32.mrf.mxu0
  %v2082 = vadd.f32 0.0, %v2081
  %v2083 = vpop.f32.mrf.mxu0
  %v2084 = vadd.f32 0.0, %v2083
  %2085 = vmatmul.bf16.gmra.mxu0 %v2046
  %v2086 = vpop.f32.mrf.mxu0
  %v2087 = vadd.f32 0.0, %v2086
  %v2088 = vpop.f32.mrf.mxu0
  %v2089 = vadd.f32 0.0, %v2088
  %2090 = vmatmul.bf16.gmra.mxu0 %v2049
  %v2091 = vpop.f32.mrf.mxu0
  %v2092 = vadd.f32 0.0, %v2091
  %v2093 = vpop.f32.mrf.mxu0
  %v2094 = vadd.f32 0.0, %v2093
  %2095 = vmatmul.bf16.gmra.mxu0 %v2052
  %v2096 = vpop.f32.mrf.mxu0
  %v2097 = vadd.f32 0.0, %v2096
  %v2098 = vpop.f32.mrf.mxu0
  %v2099 = vadd.f32 0.0, %v2098
  %2100 = vmatmul.bf16.gmra.mxu0 %v2055
  %v2101 = vpop.f32.mrf.mxu0
  %v2102 = vadd.f32 0.0, %v2101
  %v2103 = vpop.f32.mrf.mxu0
  %v2104 = vadd.f32 0.0, %v2103
  %2105 = vdwg.mxu0
  %v2106 = vmul.f32 %v2067, %v831
  %v2107 = vmul.f32 %v2069, %v836
  %v2108 = vmul.f32 %v2072, %v841
  %v2109 = vmul.f32 %v2074, %v846
  %v2110 = vmul.f32 %v2077, %v851
  %v2111 = vmul.f32 %v2079, %v856
  %v2112 = vmul.f32 %v2082, %v861
  %v2113 = vmul.f32 %v2084, %v866
  %v2114 = vmul.f32 %v2087, %v871
  %v2115 = vmul.f32 %v2089, %v876
  %v2116 = vmul.f32 %v2092, %v881
  %v2117 = vmul.f32 %v2094, %v886
  %v2118 = vmul.f32 %v2097, %v891
  %v2119 = vmul.f32 %v2099, %v896
  %v2120 = vmul.f32 %v2102, %v901
  %v2121 = vmul.f32 %v2104, %v906
  %v2122 = vpack.c.bf16 %v2107, %v2106
  %v2123 = vpack.c.bf16 %v2109, %v2108
  %v2124 = vpack.c.bf16 %v2111, %v2110
  %v2125 = vpack.c.bf16 %v2113, %v2112
  %v2126 = vpack.c.bf16 %v2115, %v2114
  %v2127 = vpack.c.bf16 %v2117, %v2116
  %v2128 = vpack.c.bf16 %v2119, %v2118
  %v2129 = vpack.c.bf16 %v2121, %v2120
  %2130 = vmatpush.bf16.msra.mxu0 %v2129
  %2131 = vmatpush.bf16.msra.mxu0 %v2128
  %2132 = vmatpush.bf16.msra.mxu0 %v2127
  %2133 = vmatpush.bf16.msra.mxu0 %v2126
  %2134 = vmatpush.bf16.msra.mxu0 %v2125
  %2135 = vmatpush.bf16.msra.mxu0 %v2124
  %2136 = vmatpush.bf16.msra.mxu0 %v2123
  %2137 = vmatpush.bf16.msra.mxu0 %v2122
  %2138 = vmatmul.bf16.gmra.mxu0 %v155
  %v2139 = vpop.f32.mrf.mxu0
  %v2140 = vadd.f32 0.0, %v2139
  %v2141 = vpop.f32.mrf.mxu0
  %v2142 = vadd.f32 0.0, %v2141
  %2143 = vmatmul.bf16.gmra.mxu0 %v156
  %v2144 = vpop.f32.mrf.mxu0
  %v2145 = vadd.f32 0.0, %v2144
  %v2146 = vpop.f32.mrf.mxu0
  %v2147 = vadd.f32 0.0, %v2146
  %2148 = vmatmul.bf16.gmra.mxu0 %v157
  %v2149 = vpop.f32.mrf.mxu0
  %v2150 = vadd.f32 0.0, %v2149
  %v2151 = vpop.f32.mrf.mxu0
  %v2152 = vadd.f32 0.0, %v2151
  %2153 = vmatmul.bf16.gmra.mxu0 %v158
  %v2154 = vpop.f32.mrf.mxu0
  %v2155 = vadd.f32 0.0, %v2154
  %v2156 = vpop.f32.mrf.mxu0
  %v2157 = vadd.f32 0.0, %v2156
  %2158 = vmatmul.bf16.gmra.mxu0 %v159
  %v2159 = vpop.f32.mrf.mxu0
  %v2160 = vadd.f32 0.0, %v2159
  %v2161 = vpop.f32.mrf.mxu0
  %v2162 = vadd.f32 0.0, %v2161
  %2163 = vmatmul.bf16.gmra.mxu0 %v160
  %v2164 = vpop.f32.mrf.mxu0
  %v2165 = vadd.f32 0.0, %v2164
  %v2166 = vpop.f32.mrf.mxu0
  %v2167 = vadd.f32 0.0, %v2166
  %2168 = vmatmul.bf16.gmra.mxu0 %v161
  %v2169 = vpop.f32.mrf.mxu0
  %v2170 = vadd.f32 0.0, %v2169
  %v2171 = vpop.f32.mrf.mxu0
  %v2172 = vadd.f32 0.0, %v2171
  %2173 = vmatmul.bf16.gmra.mxu0 %v162
  %v2174 = vpop.f32.mrf.mxu0
  %v2175 = vadd.f32 0.0, %v2174
  %v2176 = vpop.f32.mrf.mxu0
  %v2177 = vadd.f32 0.0, %v2176
  %2178 = vdwg.mxu0
  %v2179 = vmul.f32 %v2140, %v831
  %v2180 = vmul.f32 %v2142, %v836
  %v2181 = vmul.f32 %v2145, %v841
  %v2182 = vmul.f32 %v2147, %v846
  %v2183 = vmul.f32 %v2150, %v851
  %v2184 = vmul.f32 %v2152, %v856
  %v2185 = vmul.f32 %v2155, %v861
  %v2186 = vmul.f32 %v2157, %v866
  %v2187 = vmul.f32 %v2160, %v871
  %v2188 = vmul.f32 %v2162, %v876
  %v2189 = vmul.f32 %v2165, %v881
  %v2190 = vmul.f32 %v2167, %v886
  %v2191 = vmul.f32 %v2170, %v891
  %v2192 = vmul.f32 %v2172, %v896
  %v2193 = vmul.f32 %v2175, %v901
  %v2194 = vmul.f32 %v2177, %v906
  %v2195 = vld [vmem:[%s14] sm:$0x1]
  %v2197 = vperm.slane %v2195, 0
  %v2199 = vadd.f32 %v2179, %v2197
  %v2200 = vadd.f32 %v2180, %v2197
  %v2201 = vadd.f32 %v2181, %v2197
  %v2202 = vadd.f32 %v2182, %v2197
  %v2203 = vadd.f32 %v2183, %v2197
  %v2204 = vadd.f32 %v2184, %v2197
  %v2205 = vadd.f32 %v2185, %v2197
  %v2206 = vadd.f32 %v2186, %v2197
  %v2207 = vadd.f32 %v2187, %v2197
  %v2208 = vadd.f32 %v2188, %v2197
  %v2209 = vadd.f32 %v2189, %v2197
  %v2210 = vadd.f32 %v2190, %v2197
  %v2211 = vadd.f32 %v2191, %v2197
  %v2212 = vadd.f32 %v2192, %v2197
  %v2213 = vadd.f32 %v2193, %v2197
  %v2214 = vadd.f32 %v2194, %v2197
  %2215 = vst [vmem:[%s15] sm:$0xff] %v2199
  %2216 = vst [vmem:[%s15 + $0x8] sm:$0xff] %v2200
  %2217 = vst [vmem:[%s15 + $0x10] sm:$0xff] %v2201
  %2218 = vst [vmem:[%s15 + $0x18] sm:$0xff] %v2202
  %2219 = vst [vmem:[%s15 + $0x20] sm:$0xff] %v2203
  %2220 = vst [vmem:[%s15 + $0x28] sm:$0xff] %v2204
  %2221 = vst [vmem:[%s15 + $0x30] sm:$0xff] %v2205
  %2222 = vst [vmem:[%s15 + $0x38] sm:$0xff] %v2206
  %2223 = vst [vmem:[%s15 + $0x40] sm:$0xff] %v2207
  %2224 = vst [vmem:[%s15 + $0x48] sm:$0xff] %v2208
  %2225 = vst [vmem:[%s15 + $0x50] sm:$0xff] %v2209
  %2226 = vst [vmem:[%s15 + $0x58] sm:$0xff] %v2210
  %2227 = vst [vmem:[%s15 + $0x60] sm:$0xff] %v2211
  %2228 = vst [vmem:[%s15 + $0x68] sm:$0xff] %v2212
  %2229 = vst [vmem:[%s15 + $0x70] sm:$0xff] %v2213
  %2230 = vst [vmem:[%s15 + $0x78] sm:$0xff] %v2214
  // Predicated region
  $region62: #{_forward_from_graph.1} parent=0 // pred_check
    _
  $region63: #{_forward_from_graph.1} parent=0 // pred_check_branch
    %2232 = sbr.rel (0) target = $region65
  $region64: #{_forward_from_graph.1} parent=0 // pred_region
    _
  $region65: #{_forward_from_graph.1} parent=0 // pred_fallthru
    _
  // Predicated region
  $region66: #{_forward_from_graph.1} parent=0 // pred_check
    _
  $region67: #{_forward_from_graph.1} parent=0 // pred_check_branch
    %2234 = sbr.rel (0) target = $region69
  $region68: #{_forward_from_graph.1} parent=0 // pred_region
    _
  $region69: #{_forward_from_graph.1} parent=0 // pred_fallthru
    _

</llo_original>
